<compile_context>
chip_gen: v6e
topology: v6e:2x2x1
jax: 0.10.0
libtpu: 0.0.40
codegen_flags: <defaults>
</compile_context>

<pallas_src>
import jax
import jax.numpy as jnp
import numpy as np
from jax.experimental import pallas as pl
from jax.experimental.pallas import tpu as pltpu


def make_lstm_kernel(num_layers, seq_len, batch, hidden):
    """Single-invocation kernel: stacked LSTM over time + fused FC head.

    `batch` here is the per-grid-block batch (bb)."""
    T, B, H = seq_len, batch, hidden

    def kernel(*refs):
        # refs: x_ref, [w_ih_l, w_hh_l, b_l] * num_layers, fc_w, fc_b,
        #       out_ref, seq_buf, gx_buf
        x_ref = refs[0]
        layer_refs = [(refs[1 + 3 * l], refs[2 + 3 * l], refs[3 + 3 * l])
                      for l in range(num_layers)]
        fc_w_ref = refs[1 + 3 * num_layers]
        fc_b_ref = refs[2 + 3 * num_layers]
        out_ref = refs[3 + 3 * num_layers]
        seq_buf = refs[4 + 3 * num_layers]   # (T*B, H)  inter-layer h sequence
        gx_buf = refs[5 + 3 * num_layers]    # (T*B, 4H) hoisted input projection

        h_last = jnp.zeros((B, H), jnp.float32)

        for layer in range(num_layers):
            w_ih_ref, w_hh_ref, b_ref = layer_refs[layer]
            in_ref = x_ref if layer == 0 else seq_buf
            is_last = layer == num_layers - 1

            # --- Hoisted input projection: one big matmul + one bias add. ---
            w_ih = w_ih_ref[...]
            gx_buf[...] = (
                jnp.dot(in_ref[...].astype(w_ih.dtype), w_ih,
                        preferred_element_type=jnp.float32)
                + b_ref[...]
            )
            w_hh = w_hh_ref[...]

            # --- Recurrence: one small matmul + elementwise per step. ---
            def step(t, carry, w_hh=w_hh, is_last=is_last):
                h, c = carry
                row = t * B
                if B % 8 == 0:
                    row = pl.multiple_of(row, 8)    # aligned sublane slice
                gates = gx_buf[pl.ds(row, B)] + jnp.dot(
                    h.astype(w_hh.dtype), w_hh,
                    preferred_element_type=jnp.float32)      # (B, 4H)
                # Full-vreg nonlinearities (2 EUP pushes), slice afterwards.
                sig = jax.nn.sigmoid(gates)
                th = jnp.tanh(gates)
                i_g = sig[:, 0:H]
                f_g = sig[:, H:2 * H]
                o_g = sig[:, 3 * H:4 * H]
                g_g = th[:, 2 * H:3 * H]
                c_new = f_g * c + i_g * g_g
                h_new = o_g * jnp.tanh(c_new)
                if not is_last:                      # last layer: only h_T is used
                    seq_buf[pl.ds(row, B)] = h_new.astype(seq_buf.dtype)
                return (h_new, c_new)

            h0 = jnp.zeros((B, H), jnp.float32)
            c0 = jnp.zeros((B, H), jnp.float32)
            h_last, _ = jax.lax.fori_loop(0, T, step, (h0, c0), unroll=True)

        # h_last == out[:, -1, :] of the top layer.  Dropout (eval) = identity.
        fc_w = fc_w_ref[...]
        out_ref[...] = (
            jnp.dot(h_last.astype(fc_w.dtype), fc_w,
                    preferred_element_type=jnp.float32)
            + fc_b_ref[...]
        )

    return kernel


def _pick_batch_block(B):
    if B <= 8:
        return B
    for bb in (128, 64, 32, 16, 8):
        if B % bb == 0:
            return bb
    return B


def lstm_model_forward(x, layer_params, fc_w, fc_b, *, weight_dtype=jnp.float32):
    """x: (B, T, input_size) float32, batch_first like PyTorch.
       layer_params: list of (w_ih (4H,Din), w_hh (4H,H), b_ih (4H,), b_hh (4H,)).
       fc_w: (O, H), fc_b: (O,).
       weight_dtype: jnp.float32 (exact) or jnp.bfloat16 (v6e/v7x MXU fast path;
       accumulation and all gate elementwise math stay f32)."""
    B, T, D_in = x.shape
    H = layer_params[0][1].shape[1]
    O = fc_w.shape[0]
    L = len(layer_params)

    bb = _pick_batch_block(B)
    nb = B // bb

    # Layout plumbing stays in plain JAX: time-major, batch-blocked, flattened.
    x_tm = jnp.transpose(x, (1, 0, 2)).astype(jnp.float32)            # (T, B, D)
    x_blk = (x_tm.reshape(T, nb, bb, D_in)
                 .transpose(1, 0, 2, 3)
                 .reshape(nb, T * bb, D_in))                          # (nb, T*bb, D)

    inputs = [x_blk]
    for (w_ih, w_hh, b_ih, b_hh) in layer_params:
        inputs.append(jnp.transpose(w_ih).astype(weight_dtype))       # (Din, 4H)
        inputs.append(jnp.transpose(w_hh).astype(weight_dtype))       # (H, 4H)
        inputs.append((b_ih + b_hh).reshape(1, 4 * H).astype(jnp.float32))
    inputs.append(jnp.transpose(fc_w).astype(weight_dtype))           # (H, O)
    inputs.append(fc_b.reshape(1, O).astype(jnp.float32))             # (1, O)

    in_specs = [pl.BlockSpec((pl.Squeezed(), T * bb, D_in), lambda i: (i, 0, 0))]
    for _ in inputs[1:]:
        in_specs.append(pl.BlockSpec(inputs[len(in_specs)].shape, lambda i: (0, 0)))
    out_spec = pl.BlockSpec((bb, O), lambda i: (i, 0))

    # Advisory cost estimate (helps XLA schedule surrounding transposes/casts).
    flops = 0
    d = D_in
    for _ in range(L):
        flops += 2 * T * bb * (d + H) * 4 * H
        d = H
    flops += 2 * bb * H * O
    flops *= nb
    transc = nb * L * T * bb * (2 * 4 * H + H)
    bytes_accessed = int(sum(int(np.prod(a.shape)) * a.dtype.itemsize for a in inputs)
                         + B * O * 4)

    kernel = make_lstm_kernel(L, T, bb, H)

    return pl.pallas_call(
        kernel,
        out_shape=jax.ShapeDtypeStruct((B, O), jnp.float32),
        grid_spec=pltpu.PrefetchScalarGridSpec(
            num_scalar_prefetch=0,
            grid=(nb,),                                    # batch blocks
            in_specs=in_specs,
            out_specs=out_spec,
            scratch_shapes=[
                pltpu.VMEM((T * bb, H), weight_dtype),     # single seq buffer (in-place)
                pltpu.VMEM((T * bb, 4 * H), jnp.float32),  # hoisted gates_x
            ],
        ),
        compiler_params=pltpu.CompilerParams(
            dimension_semantics=("parallel",),             # shard batch blocks (v7x 2 TCs)
        ),
        cost_estimate=pl.CostEstimate(
            flops=int(flops),
            transcendentals=int(transc),
            bytes_accessed=bytes_accessed,
        ),
    )(*inputs)


def reference_forward(x, layer_params, fc_w, fc_b):
    """Pure-JAX reference matching torch.nn.LSTM + Linear semantics."""
    B, T, _ = x.shape
    inp = x
    for (w_ih, w_hh, b_ih, b_hh) in layer_params:
        H = w_hh.shape[1]
        h = jnp.zeros((B, H), jnp.float32)
        c = jnp.zeros((B, H), jnp.float32)
        outs = []
        for t in range(T):
            g = inp[:, t, :] @ w_ih.T + h @ w_hh.T + b_ih + b_hh
            i_g, f_g, g_g, o_g = jnp.split(g, 4, axis=1)
            c = jax.nn.sigmoid(f_g) * c + jax.nn.sigmoid(i_g) * jnp.tanh(g_g)
            h = jax.nn.sigmoid(o_g) * jnp.tanh(c)
            outs.append(h)
        inp = jnp.stack(outs, axis=1)
    return inp[:, -1, :] @ fc_w.T + fc_b


if __name__ == "__main__":
    # Small shapes consistent with the module's forward.
    B, T = 8, 8
    input_size, hidden_size, num_layers, output_size = 8, 32, 2, 1

    key = jax.random.PRNGKey(0)
    k = 1.0 / np.sqrt(hidden_size)

    def uni(key, shape):
        return jax.random.uniform(key, shape, jnp.float32, minval=-k, maxval=k)

    keys = jax.random.split(key, 4 * num_layers + 3)
    layer_params = []
    ki = 0
    for layer in range(num_layers):
        d_in = input_size if layer == 0 else hidden_size
        w_ih = uni(keys[ki], (4 * hidden_size, d_in)); ki += 1
        w_hh = uni(keys[ki], (4 * hidden_size, hidden_size)); ki += 1
        b_ih = uni(keys[ki], (4 * hidden_size,)); ki += 1
        b_hh = uni(keys[ki], (4 * hidden_size,)); ki += 1
        layer_params.append((w_ih, w_hh, b_ih, b_hh))
    fc_w = uni(keys[ki], (output_size, hidden_size)); ki += 1
    fc_b = uni(keys[ki], (output_size,)); ki += 1
    x = jax.random.normal(keys[ki], (B, T, input_size), jnp.float32)

    ref = jax.block_until_ready(reference_forward(x, layer_params, fc_w, fc_b))

    # Exact f32 path (matches PyTorch semantics).
    out = jax.block_until_ready(lstm_model_forward(x, layer_params, fc_w, fc_b))
    assert out.shape == (B, output_size)
    np.testing.assert_allclose(np.asarray(out), np.asarray(ref), atol=1e-4, rtol=1e-4)

    # bf16-weight MXU fast path (v6e/v7x): f32 accumulate, f32 gate math.
    out_bf16 = jax.block_until_ready(
        lstm_model_forward(x, layer_params, fc_w, fc_b, weight_dtype=jnp.bfloat16))
    np.testing.assert_allclose(np.asarray(out_bf16), np.asarray(ref),
                               atol=5e-2, rtol=5e-2)

    print("KERNEL_OK")
</pallas_src>

<mosaic_0001>
module attributes {stable_mosaic.version = 11 : i64} {
  func.func @kernel(%arg0: i32, %arg1: memref<1x64x8xf32, #tpu.memory_space<vmem>>, %arg2: memref<8x128xf32, #tpu.memory_space<vmem>>, %arg3: memref<32x128xf32, #tpu.memory_space<vmem>>, %arg4: memref<1x128xf32, #tpu.memory_space<vmem>>, %arg5: memref<32x128xf32, #tpu.memory_space<vmem>>, %arg6: memref<32x128xf32, #tpu.memory_space<vmem>>, %arg7: memref<1x128xf32, #tpu.memory_space<vmem>>, %arg8: memref<32x1xf32, #tpu.memory_space<vmem>>, %arg9: memref<1x1xf32, #tpu.memory_space<vmem>>, %arg10: memref<8x1xf32, #tpu.memory_space<vmem>>, %arg11: memref<64x32xf32, #tpu.memory_space<vmem>>, %arg12: memref<64x128xf32, #tpu.memory_space<vmem>>) attributes {dimension_semantics = [#tpu.dimension_semantics<parallel>], iteration_bounds = array<i64: 1>, scalar_prefetch = 0 : i64, scratch_operands = 2 : i64, tpu.core_type = #tpu.core_type<tc>, window_params = [{transform_indices = @transform_0, window_bounds = array<i64: 1, 64, 8>}, {pipeline_mode = #tpu.pipeline_mode<synchronous>, transform_indices = @transform_1, window_bounds = array<i64: 8, 128>}, {pipeline_mode = #tpu.pipeline_mode<synchronous>, transform_indices = @transform_2, window_bounds = array<i64: 32, 128>}, {pipeline_mode = #tpu.pipeline_mode<synchronous>, transform_indices = @transform_3, window_bounds = array<i64: 1, 128>}, {pipeline_mode = #tpu.pipeline_mode<synchronous>, transform_indices = @transform_4, window_bounds = array<i64: 32, 128>}, {pipeline_mode = #tpu.pipeline_mode<synchronous>, transform_indices = @transform_5, window_bounds = array<i64: 32, 128>}, {pipeline_mode = #tpu.pipeline_mode<synchronous>, transform_indices = @transform_6, window_bounds = array<i64: 1, 128>}, {pipeline_mode = #tpu.pipeline_mode<synchronous>, transform_indices = @transform_7, window_bounds = array<i64: 32, 1>}, {pipeline_mode = #tpu.pipeline_mode<synchronous>, transform_indices = @transform_8, window_bounds = array<i64: 1, 1>}, {transform_indices = @transform_9, window_bounds = array<i64: 8, 1>}]} {
    %c0 = arith.constant 0 : index
    %c0_0 = arith.constant 0 : index
    %0 = vector.load %arg2[%c0, %c0_0] : memref<8x128xf32, #tpu.memory_space<vmem>>, vector<8x128xf32>
    %c0_1 = arith.constant 0 : index
    %c0_2 = arith.constant 0 : index
    %c0_3 = arith.constant 0 : index
    %1 = vector.load %arg1[%c0_1, %c0_2, %c0_3] : memref<1x64x8xf32, #tpu.memory_space<vmem>>, vector<1x64x8xf32>
    %2 = vector.shape_cast %1 : vector<1x64x8xf32> to vector<64x8xf32>
    %cst = arith.constant dense<0.000000e+00> : vector<64x128xf32>
    %3 = tpu.matmul %2, %0, %cst {dimension_numbers = #tpu.dot_dimension_numbers<[1], [0], [0], [1], [0, 0, 1, 1], [], []>} : vector<64x8xf32>, vector<8x128xf32>, vector<64x128xf32> -> vector<64x128xf32>
    %c0_4 = arith.constant 0 : index
    %c0_5 = arith.constant 0 : index
    %4 = vector.load %arg4[%c0_4, %c0_5] : memref<1x128xf32, #tpu.memory_space<vmem>>, vector<1x128xf32>
    %5 = vector.broadcast %4 : vector<1x128xf32> to vector<64x128xf32>
    %6 = arith.addf %3, %5 : vector<64x128xf32>
    %c0_6 = arith.constant 0 : index
    %c0_7 = arith.constant 0 : index
    %7 = vector.load %arg12[%c0_6, %c0_7] : memref<64x128xf32, #tpu.memory_space<vmem>>, vector<64x128xf32>
    tpu.vector_store %arg12[%c0_6, %c0_7], %6 {strides = array<i32>} : memref<64x128xf32, #tpu.memory_space<vmem>>, vector<64x128xf32>,
    %c0_8 = arith.constant 0 : index
    %c0_9 = arith.constant 0 : index
    %8 = vector.load %arg3[%c0_8, %c0_9] : memref<32x128xf32, #tpu.memory_space<vmem>>, vector<32x128xf32>
    %cst_10 = arith.constant 0.000000e+00 : f32
    %9 = vector.broadcast %cst_10 : f32 to vector<8x32xf32>
    %cst_11 = arith.constant 0.000000e+00 : f32
    %10 = vector.broadcast %cst_11 : f32 to vector<8x32xf32>
    %c0_i32 = arith.constant 0 : i32
    %c8_i32 = arith.constant 8 : i32
    %11 = arith.muli %c0_i32, %c8_i32 : i32
    %12 = tpu.assume_multiple %11, 8 : i32
    %13 = arith.index_cast %12 : i32 to index
    %c0_12 = arith.constant 0 : index
    %14 = vector.load %arg12[%13, %c0_12] : memref<64x128xf32, #tpu.memory_space<vmem>>, vector<8x128xf32>
    %cst_13 = arith.constant dense<0.000000e+00> : vector<8x128xf32>
    %15 = tpu.matmul %9, %8, %cst_13 {dimension_numbers = #tpu.dot_dimension_numbers<[1], [0], [0], [1], [0, 0, 1, 1], [], []>} : vector<8x32xf32>, vector<32x128xf32>, vector<8x128xf32> -> vector<8x128xf32>
    %16 = arith.addf %14, %15 : vector<8x128xf32>
    %17 = arith.negf %16 : vector<8x128xf32>
    %18 = math.exp %17 : vector<8x128xf32>
    %cst_14 = arith.constant 1.000000e+00 : f32
    %19 = vector.broadcast %cst_14 : f32 to vector<8x128xf32>
    %20 = arith.addf %19, %18 : vector<8x128xf32>
    %21 = arith.divf %19, %20 : vector<8x128xf32>
    %22 = math.tanh %16 : vector<8x128xf32>
    %23 = vector.extract_strided_slice %21 {offsets = [0, 0], sizes = [8, 32], strides = [1, 1]} : vector<8x128xf32> to vector<8x32xf32>
    %24 = vector.extract_strided_slice %21 {offsets = [0, 32], sizes = [8, 32], strides = [1, 1]} : vector<8x128xf32> to vector<8x32xf32>
    %25 = vector.extract_strided_slice %21 {offsets = [0, 96], sizes = [8, 32], strides = [1, 1]} : vector<8x128xf32> to vector<8x32xf32>
    %26 = vector.extract_strided_slice %22 {offsets = [0, 64], sizes = [8, 32], strides = [1, 1]} : vector<8x128xf32> to vector<8x32xf32>
    %27 = arith.mulf %24, %10 : vector<8x32xf32>
    %28 = arith.mulf %23, %26 : vector<8x32xf32>
    %29 = arith.addf %27, %28 : vector<8x32xf32>
    %30 = math.tanh %29 : vector<8x32xf32>
    %31 = arith.mulf %25, %30 : vector<8x32xf32>
    %32 = arith.index_cast %12 : i32 to index
    %c0_15 = arith.constant 0 : index
    %33 = vector.load %arg11[%32, %c0_15] : memref<64x32xf32, #tpu.memory_space<vmem>>, vector<8x32xf32>
    tpu.vector_store %arg11[%32, %c0_15], %31 {strides = array<i32>} : memref<64x32xf32, #tpu.memory_space<vmem>>, vector<8x32xf32>,
    %c1_i32 = arith.constant 1 : i32
    %c8_i32_16 = arith.constant 8 : i32
    %34 = arith.muli %c1_i32, %c8_i32_16 : i32
    %35 = tpu.assume_multiple %34, 8 : i32
    %36 = arith.index_cast %35 : i32 to index
    %c0_17 = arith.constant 0 : index
    %37 = vector.load %arg12[%36, %c0_17] : memref<64x128xf32, #tpu.memory_space<vmem>>, vector<8x128xf32>
    %cst_18 = arith.constant dense<0.000000e+00> : vector<8x128xf32>
    %38 = tpu.matmul %31, %8, %cst_18 {dimension_numbers = #tpu.dot_dimension_numbers<[1], [0], [0], [1], [0, 0, 1, 1], [], []>} : vector<8x32xf32>, vector<32x128xf32>, vector<8x128xf32> -> vector<8x128xf32>
    %39 = arith.addf %37, %38 : vector<8x128xf32>
    %40 = arith.negf %39 : vector<8x128xf32>
    %41 = math.exp %40 : vector<8x128xf32>
    %cst_19 = arith.constant 1.000000e+00 : f32
    %42 = vector.broadcast %cst_19 : f32 to vector<8x128xf32>
    %43 = arith.addf %42, %41 : vector<8x128xf32>
    %44 = arith.divf %42, %43 : vector<8x128xf32>
    %45 = math.tanh %39 : vector<8x128xf32>
    %46 = vector.extract_strided_slice %44 {offsets = [0, 0], sizes = [8, 32], strides = [1, 1]} : vector<8x128xf32> to vector<8x32xf32>
    %47 = vector.extract_strided_slice %44 {offsets = [0, 32], sizes = [8, 32], strides = [1, 1]} : vector<8x128xf32> to vector<8x32xf32>
    %48 = vector.extract_strided_slice %44 {offsets = [0, 96], sizes = [8, 32], strides = [1, 1]} : vector<8x128xf32> to vector<8x32xf32>
    %49 = vector.extract_strided_slice %45 {offsets = [0, 64], sizes = [8, 32], strides = [1, 1]} : vector<8x128xf32> to vector<8x32xf32>
    %50 = arith.mulf %47, %29 : vector<8x32xf32>
    %51 = arith.mulf %46, %49 : vector<8x32xf32>
    %52 = arith.addf %50, %51 : vector<8x32xf32>
    %53 = math.tanh %52 : vector<8x32xf32>
    %54 = arith.mulf %48, %53 : vector<8x32xf32>
    %55 = arith.index_cast %35 : i32 to index
    %c0_20 = arith.constant 0 : index
    %56 = vector.load %arg11[%55, %c0_20] : memref<64x32xf32, #tpu.memory_space<vmem>>, vector<8x32xf32>
    tpu.vector_store %arg11[%55, %c0_20], %54 {strides = array<i32>} : memref<64x32xf32, #tpu.memory_space<vmem>>, vector<8x32xf32>,
    %c2_i32 = arith.constant 2 : i32
    %c8_i32_21 = arith.constant 8 : i32
    %57 = arith.muli %c2_i32, %c8_i32_21 : i32
    %58 = tpu.assume_multiple %57, 8 : i32
    %59 = arith.index_cast %58 : i32 to index
    %c0_22 = arith.constant 0 : index
    %60 = vector.load %arg12[%59, %c0_22] : memref<64x128xf32, #tpu.memory_space<vmem>>, vector<8x128xf32>
    %cst_23 = arith.constant dense<0.000000e+00> : vector<8x128xf32>
    %61 = tpu.matmul %54, %8, %cst_23 {dimension_numbers = #tpu.dot_dimension_numbers<[1], [0], [0], [1], [0, 0, 1, 1], [], []>} : vector<8x32xf32>, vector<32x128xf32>, vector<8x128xf32> -> vector<8x128xf32>
    %62 = arith.addf %60, %61 : vector<8x128xf32>
    %63 = arith.negf %62 : vector<8x128xf32>
    %64 = math.exp %63 : vector<8x128xf32>
    %cst_24 = arith.constant 1.000000e+00 : f32
    %65 = vector.broadcast %cst_24 : f32 to vector<8x128xf32>
    %66 = arith.addf %65, %64 : vector<8x128xf32>
    %67 = arith.divf %65, %66 : vector<8x128xf32>
    %68 = math.tanh %62 : vector<8x128xf32>
    %69 = vector.extract_strided_slice %67 {offsets = [0, 0], sizes = [8, 32], strides = [1, 1]} : vector<8x128xf32> to vector<8x32xf32>
    %70 = vector.extract_strided_slice %67 {offsets = [0, 32], sizes = [8, 32], strides = [1, 1]} : vector<8x128xf32> to vector<8x32xf32>
    %71 = vector.extract_strided_slice %67 {offsets = [0, 96], sizes = [8, 32], strides = [1, 1]} : vector<8x128xf32> to vector<8x32xf32>
    %72 = vector.extract_strided_slice %68 {offsets = [0, 64], sizes = [8, 32], strides = [1, 1]} : vector<8x128xf32> to vector<8x32xf32>
    %73 = arith.mulf %70, %52 : vector<8x32xf32>
    %74 = arith.mulf %69, %72 : vector<8x32xf32>
    %75 = arith.addf %73, %74 : vector<8x32xf32>
    %76 = math.tanh %75 : vector<8x32xf32>
    %77 = arith.mulf %71, %76 : vector<8x32xf32>
    %78 = arith.index_cast %58 : i32 to index
    %c0_25 = arith.constant 0 : index
    %79 = vector.load %arg11[%78, %c0_25] : memref<64x32xf32, #tpu.memory_space<vmem>>, vector<8x32xf32>
    tpu.vector_store %arg11[%78, %c0_25], %77 {strides = array<i32>} : memref<64x32xf32, #tpu.memory_space<vmem>>, vector<8x32xf32>,
    %c3_i32 = arith.constant 3 : i32
    %c8_i32_26 = arith.constant 8 : i32
    %80 = arith.muli %c3_i32, %c8_i32_26 : i32
    %81 = tpu.assume_multiple %80, 8 : i32
    %82 = arith.index_cast %81 : i32 to index
    %c0_27 = arith.constant 0 : index
    %83 = vector.load %arg12[%82, %c0_27] : memref<64x128xf32, #tpu.memory_space<vmem>>, vector<8x128xf32>
    %cst_28 = arith.constant dense<0.000000e+00> : vector<8x128xf32>
    %84 = tpu.matmul %77, %8, %cst_28 {dimension_numbers = #tpu.dot_dimension_numbers<[1], [0], [0], [1], [0, 0, 1, 1], [], []>} : vector<8x32xf32>, vector<32x128xf32>, vector<8x128xf32> -> vector<8x128xf32>
    %85 = arith.addf %83, %84 : vector<8x128xf32>
    %86 = arith.negf %85 : vector<8x128xf32>
    %87 = math.exp %86 : vector<8x128xf32>
    %cst_29 = arith.constant 1.000000e+00 : f32
    %88 = vector.broadcast %cst_29 : f32 to vector<8x128xf32>
    %89 = arith.addf %88, %87 : vector<8x128xf32>
    %90 = arith.divf %88, %89 : vector<8x128xf32>
    %91 = math.tanh %85 : vector<8x128xf32>
    %92 = vector.extract_strided_slice %90 {offsets = [0, 0], sizes = [8, 32], strides = [1, 1]} : vector<8x128xf32> to vector<8x32xf32>
    %93 = vector.extract_strided_slice %90 {offsets = [0, 32], sizes = [8, 32], strides = [1, 1]} : vector<8x128xf32> to vector<8x32xf32>
    %94 = vector.extract_strided_slice %90 {offsets = [0, 96], sizes = [8, 32], strides = [1, 1]} : vector<8x128xf32> to vector<8x32xf32>
    %95 = vector.extract_strided_slice %91 {offsets = [0, 64], sizes = [8, 32], strides = [1, 1]} : vector<8x128xf32> to vector<8x32xf32>
    %96 = arith.mulf %93, %75 : vector<8x32xf32>
    %97 = arith.mulf %92, %95 : vector<8x32xf32>
    %98 = arith.addf %96, %97 : vector<8x32xf32>
    %99 = math.tanh %98 : vector<8x32xf32>
    %100 = arith.mulf %94, %99 : vector<8x32xf32>
    %101 = arith.index_cast %81 : i32 to index
    %c0_30 = arith.constant 0 : index
    %102 = vector.load %arg11[%101, %c0_30] : memref<64x32xf32, #tpu.memory_space<vmem>>, vector<8x32xf32>
    tpu.vector_store %arg11[%101, %c0_30], %100 {strides = array<i32>} : memref<64x32xf32, #tpu.memory_space<vmem>>, vector<8x32xf32>,
    %c4_i32 = arith.constant 4 : i32
    %c8_i32_31 = arith.constant 8 : i32
    %103 = arith.muli %c4_i32, %c8_i32_31 : i32
    %104 = tpu.assume_multiple %103, 8 : i32
    %105 = arith.index_cast %104 : i32 to index
    %c0_32 = arith.constant 0 : index
    %106 = vector.load %arg12[%105, %c0_32] : memref<64x128xf32, #tpu.memory_space<vmem>>, vector<8x128xf32>
    %cst_33 = arith.constant dense<0.000000e+00> : vector<8x128xf32>
    %107 = tpu.matmul %100, %8, %cst_33 {dimension_numbers = #tpu.dot_dimension_numbers<[1], [0], [0], [1], [0, 0, 1, 1], [], []>} : vector<8x32xf32>, vector<32x128xf32>, vector<8x128xf32> -> vector<8x128xf32>
    %108 = arith.addf %106, %107 : vector<8x128xf32>
    %109 = arith.negf %108 : vector<8x128xf32>
    %110 = math.exp %109 : vector<8x128xf32>
    %cst_34 = arith.constant 1.000000e+00 : f32
    %111 = vector.broadcast %cst_34 : f32 to vector<8x128xf32>
    %112 = arith.addf %111, %110 : vector<8x128xf32>
    %113 = arith.divf %111, %112 : vector<8x128xf32>
    %114 = math.tanh %108 : vector<8x128xf32>
    %115 = vector.extract_strided_slice %113 {offsets = [0, 0], sizes = [8, 32], strides = [1, 1]} : vector<8x128xf32> to vector<8x32xf32>
    %116 = vector.extract_strided_slice %113 {offsets = [0, 32], sizes = [8, 32], strides = [1, 1]} : vector<8x128xf32> to vector<8x32xf32>
    %117 = vector.extract_strided_slice %113 {offsets = [0, 96], sizes = [8, 32], strides = [1, 1]} : vector<8x128xf32> to vector<8x32xf32>
    %118 = vector.extract_strided_slice %114 {offsets = [0, 64], sizes = [8, 32], strides = [1, 1]} : vector<8x128xf32> to vector<8x32xf32>
    %119 = arith.mulf %116, %98 : vector<8x32xf32>
    %120 = arith.mulf %115, %118 : vector<8x32xf32>
    %121 = arith.addf %119, %120 : vector<8x32xf32>
    %122 = math.tanh %121 : vector<8x32xf32>
    %123 = arith.mulf %117, %122 : vector<8x32xf32>
    %124 = arith.index_cast %104 : i32 to index
    %c0_35 = arith.constant 0 : index
    %125 = vector.load %arg11[%124, %c0_35] : memref<64x32xf32, #tpu.memory_space<vmem>>, vector<8x32xf32>
    tpu.vector_store %arg11[%124, %c0_35], %123 {strides = array<i32>} : memref<64x32xf32, #tpu.memory_space<vmem>>, vector<8x32xf32>,
    %c5_i32 = arith.constant 5 : i32
    %c8_i32_36 = arith.constant 8 : i32
    %126 = arith.muli %c5_i32, %c8_i32_36 : i32
    %127 = tpu.assume_multiple %126, 8 : i32
    %128 = arith.index_cast %127 : i32 to index
    %c0_37 = arith.constant 0 : index
    %129 = vector.load %arg12[%128, %c0_37] : memref<64x128xf32, #tpu.memory_space<vmem>>, vector<8x128xf32>
    %cst_38 = arith.constant dense<0.000000e+00> : vector<8x128xf32>
    %130 = tpu.matmul %123, %8, %cst_38 {dimension_numbers = #tpu.dot_dimension_numbers<[1], [0], [0], [1], [0, 0, 1, 1], [], []>} : vector<8x32xf32>, vector<32x128xf32>, vector<8x128xf32> -> vector<8x128xf32>
    %131 = arith.addf %129, %130 : vector<8x128xf32>
    %132 = arith.negf %131 : vector<8x128xf32>
    %133 = math.exp %132 : vector<8x128xf32>
    %cst_39 = arith.constant 1.000000e+00 : f32
    %134 = vector.broadcast %cst_39 : f32 to vector<8x128xf32>
    %135 = arith.addf %134, %133 : vector<8x128xf32>
    %136 = arith.divf %134, %135 : vector<8x128xf32>
    %137 = math.tanh %131 : vector<8x128xf32>
    %138 = vector.extract_strided_slice %136 {offsets = [0, 0], sizes = [8, 32], strides = [1, 1]} : vector<8x128xf32> to vector<8x32xf32>
    %139 = vector.extract_strided_slice %136 {offsets = [0, 32], sizes = [8, 32], strides = [1, 1]} : vector<8x128xf32> to vector<8x32xf32>
    %140 = vector.extract_strided_slice %136 {offsets = [0, 96], sizes = [8, 32], strides = [1, 1]} : vector<8x128xf32> to vector<8x32xf32>
    %141 = vector.extract_strided_slice %137 {offsets = [0, 64], sizes = [8, 32], strides = [1, 1]} : vector<8x128xf32> to vector<8x32xf32>
    %142 = arith.mulf %139, %121 : vector<8x32xf32>
    %143 = arith.mulf %138, %141 : vector<8x32xf32>
    %144 = arith.addf %142, %143 : vector<8x32xf32>
    %145 = math.tanh %144 : vector<8x32xf32>
    %146 = arith.mulf %140, %145 : vector<8x32xf32>
    %147 = arith.index_cast %127 : i32 to index
    %c0_40 = arith.constant 0 : index
    %148 = vector.load %arg11[%147, %c0_40] : memref<64x32xf32, #tpu.memory_space<vmem>>, vector<8x32xf32>
    tpu.vector_store %arg11[%147, %c0_40], %146 {strides = array<i32>} : memref<64x32xf32, #tpu.memory_space<vmem>>, vector<8x32xf32>,
    %c6_i32 = arith.constant 6 : i32
    %c8_i32_41 = arith.constant 8 : i32
    %149 = arith.muli %c6_i32, %c8_i32_41 : i32
    %150 = tpu.assume_multiple %149, 8 : i32
    %151 = arith.index_cast %150 : i32 to index
    %c0_42 = arith.constant 0 : index
    %152 = vector.load %arg12[%151, %c0_42] : memref<64x128xf32, #tpu.memory_space<vmem>>, vector<8x128xf32>
    %cst_43 = arith.constant dense<0.000000e+00> : vector<8x128xf32>
    %153 = tpu.matmul %146, %8, %cst_43 {dimension_numbers = #tpu.dot_dimension_numbers<[1], [0], [0], [1], [0, 0, 1, 1], [], []>} : vector<8x32xf32>, vector<32x128xf32>, vector<8x128xf32> -> vector<8x128xf32>
    %154 = arith.addf %152, %153 : vector<8x128xf32>
    %155 = arith.negf %154 : vector<8x128xf32>
    %156 = math.exp %155 : vector<8x128xf32>
    %cst_44 = arith.constant 1.000000e+00 : f32
    %157 = vector.broadcast %cst_44 : f32 to vector<8x128xf32>
    %158 = arith.addf %157, %156 : vector<8x128xf32>
    %159 = arith.divf %157, %158 : vector<8x128xf32>
    %160 = math.tanh %154 : vector<8x128xf32>
    %161 = vector.extract_strided_slice %159 {offsets = [0, 0], sizes = [8, 32], strides = [1, 1]} : vector<8x128xf32> to vector<8x32xf32>
    %162 = vector.extract_strided_slice %159 {offsets = [0, 32], sizes = [8, 32], strides = [1, 1]} : vector<8x128xf32> to vector<8x32xf32>
    %163 = vector.extract_strided_slice %159 {offsets = [0, 96], sizes = [8, 32], strides = [1, 1]} : vector<8x128xf32> to vector<8x32xf32>
    %164 = vector.extract_strided_slice %160 {offsets = [0, 64], sizes = [8, 32], strides = [1, 1]} : vector<8x128xf32> to vector<8x32xf32>
    %165 = arith.mulf %162, %144 : vector<8x32xf32>
    %166 = arith.mulf %161, %164 : vector<8x32xf32>
    %167 = arith.addf %165, %166 : vector<8x32xf32>
    %168 = math.tanh %167 : vector<8x32xf32>
    %169 = arith.mulf %163, %168 : vector<8x32xf32>
    %170 = arith.index_cast %150 : i32 to index
    %c0_45 = arith.constant 0 : index
    %171 = vector.load %arg11[%170, %c0_45] : memref<64x32xf32, #tpu.memory_space<vmem>>, vector<8x32xf32>
    tpu.vector_store %arg11[%170, %c0_45], %169 {strides = array<i32>} : memref<64x32xf32, #tpu.memory_space<vmem>>, vector<8x32xf32>,
    %c7_i32 = arith.constant 7 : i32
    %c8_i32_46 = arith.constant 8 : i32
    %172 = arith.muli %c7_i32, %c8_i32_46 : i32
    %173 = tpu.assume_multiple %172, 8 : i32
    %174 = arith.index_cast %173 : i32 to index
    %c0_47 = arith.constant 0 : index
    %175 = vector.load %arg12[%174, %c0_47] : memref<64x128xf32, #tpu.memory_space<vmem>>, vector<8x128xf32>
    %cst_48 = arith.constant dense<0.000000e+00> : vector<8x128xf32>
    %176 = tpu.matmul %169, %8, %cst_48 {dimension_numbers = #tpu.dot_dimension_numbers<[1], [0], [0], [1], [0, 0, 1, 1], [], []>} : vector<8x32xf32>, vector<32x128xf32>, vector<8x128xf32> -> vector<8x128xf32>
    %177 = arith.addf %175, %176 : vector<8x128xf32>
    %178 = arith.negf %177 : vector<8x128xf32>
    %179 = math.exp %178 : vector<8x128xf32>
    %cst_49 = arith.constant 1.000000e+00 : f32
    %180 = vector.broadcast %cst_49 : f32 to vector<8x128xf32>
    %181 = arith.addf %180, %179 : vector<8x128xf32>
    %182 = arith.divf %180, %181 : vector<8x128xf32>
    %183 = math.tanh %177 : vector<8x128xf32>
    %184 = vector.extract_strided_slice %182 {offsets = [0, 0], sizes = [8, 32], strides = [1, 1]} : vector<8x128xf32> to vector<8x32xf32>
    %185 = vector.extract_strided_slice %182 {offsets = [0, 32], sizes = [8, 32], strides = [1, 1]} : vector<8x128xf32> to vector<8x32xf32>
    %186 = vector.extract_strided_slice %182 {offsets = [0, 96], sizes = [8, 32], strides = [1, 1]} : vector<8x128xf32> to vector<8x32xf32>
    %187 = vector.extract_strided_slice %183 {offsets = [0, 64], sizes = [8, 32], strides = [1, 1]} : vector<8x128xf32> to vector<8x32xf32>
    %188 = arith.mulf %185, %167 : vector<8x32xf32>
    %189 = arith.mulf %184, %187 : vector<8x32xf32>
    %190 = arith.addf %188, %189 : vector<8x32xf32>
    %191 = math.tanh %190 : vector<8x32xf32>
    %192 = arith.mulf %186, %191 : vector<8x32xf32>
    %193 = arith.index_cast %173 : i32 to index
    %c0_50 = arith.constant 0 : index
    %194 = vector.load %arg11[%193, %c0_50] : memref<64x32xf32, #tpu.memory_space<vmem>>, vector<8x32xf32>
    tpu.vector_store %arg11[%193, %c0_50], %192 {strides = array<i32>} : memref<64x32xf32, #tpu.memory_space<vmem>>, vector<8x32xf32>,
    %c8_i32_51 = arith.constant 8 : i32
    %c0_52 = arith.constant 0 : index
    %c0_53 = arith.constant 0 : index
    %195 = vector.load %arg5[%c0_52, %c0_53] : memref<32x128xf32, #tpu.memory_space<vmem>>, vector<32x128xf32>
    %c0_54 = arith.constant 0 : index
    %c0_55 = arith.constant 0 : index
    %196 = vector.load %arg11[%c0_54, %c0_55] : memref<64x32xf32, #tpu.memory_space<vmem>>, vector<64x32xf32>
    %cst_56 = arith.constant dense<0.000000e+00> : vector<64x128xf32>
    %197 = tpu.matmul %196, %195, %cst_56 {dimension_numbers = #tpu.dot_dimension_numbers<[1], [0], [0], [1], [0, 0, 1, 1], [], []>} : vector<64x32xf32>, vector<32x128xf32>, vector<64x128xf32> -> vector<64x128xf32>
    %c0_57 = arith.constant 0 : index
    %c0_58 = arith.constant 0 : index
    %198 = vector.load %arg7[%c0_57, %c0_58] : memref<1x128xf32, #tpu.memory_space<vmem>>, vector<1x128xf32>
    %199 = vector.broadcast %198 : vector<1x128xf32> to vector<64x128xf32>
    %200 = arith.addf %197, %199 : vector<64x128xf32>
    %c0_59 = arith.constant 0 : index
    %c0_60 = arith.constant 0 : index
    %201 = vector.load %arg12[%c0_59, %c0_60] : memref<64x128xf32, #tpu.memory_space<vmem>>, vector<64x128xf32>
    tpu.vector_store %arg12[%c0_59, %c0_60], %200 {strides = array<i32>} : memref<64x128xf32, #tpu.memory_space<vmem>>, vector<64x128xf32>,
    %c0_61 = arith.constant 0 : index
    %c0_62 = arith.constant 0 : index
    %202 = vector.load %arg6[%c0_61, %c0_62] : memref<32x128xf32, #tpu.memory_space<vmem>>, vector<32x128xf32>
    %cst_63 = arith.constant 0.000000e+00 : f32
    %203 = vector.broadcast %cst_63 : f32 to vector<8x32xf32>
    %cst_64 = arith.constant 0.000000e+00 : f32
    %204 = vector.broadcast %cst_64 : f32 to vector<8x32xf32>
    %c0_i32_65 = arith.constant 0 : i32
    %c8_i32_66 = arith.constant 8 : i32
    %205 = arith.muli %c0_i32_65, %c8_i32_66 : i32
    %206 = tpu.assume_multiple %205, 8 : i32
    %207 = arith.index_cast %206 : i32 to index
    %c0_67 = arith.constant 0 : index
    %208 = vector.load %arg12[%207, %c0_67] : memref<64x128xf32, #tpu.memory_space<vmem>>, vector<8x128xf32>
    %cst_68 = arith.constant dense<0.000000e+00> : vector<8x128xf32>
    %209 = tpu.matmul %203, %202, %cst_68 {dimension_numbers = #tpu.dot_dimension_numbers<[1], [0], [0], [1], [0, 0, 1, 1], [], []>} : vector<8x32xf32>, vector<32x128xf32>, vector<8x128xf32> -> vector<8x128xf32>
    %210 = arith.addf %208, %209 : vector<8x128xf32>
    %211 = arith.negf %210 : vector<8x128xf32>
    %212 = math.exp %211 : vector<8x128xf32>
    %cst_69 = arith.constant 1.000000e+00 : f32
    %213 = vector.broadcast %cst_69 : f32 to vector<8x128xf32>
    %214 = arith.addf %213, %212 : vector<8x128xf32>
    %215 = arith.divf %213, %214 : vector<8x128xf32>
    %216 = math.tanh %210 : vector<8x128xf32>
    %217 = vector.extract_strided_slice %215 {offsets = [0, 0], sizes = [8, 32], strides = [1, 1]} : vector<8x128xf32> to vector<8x32xf32>
    %218 = vector.extract_strided_slice %215 {offsets = [0, 32], sizes = [8, 32], strides = [1, 1]} : vector<8x128xf32> to vector<8x32xf32>
    %219 = vector.extract_strided_slice %215 {offsets = [0, 96], sizes = [8, 32], strides = [1, 1]} : vector<8x128xf32> to vector<8x32xf32>
    %220 = vector.extract_strided_slice %216 {offsets = [0, 64], sizes = [8, 32], strides = [1, 1]} : vector<8x128xf32> to vector<8x32xf32>
    %221 = arith.mulf %218, %204 : vector<8x32xf32>
    %222 = arith.mulf %217, %220 : vector<8x32xf32>
    %223 = arith.addf %221, %222 : vector<8x32xf32>
    %224 = math.tanh %223 : vector<8x32xf32>
    %225 = arith.mulf %219, %224 : vector<8x32xf32>
    %c1_i32_70 = arith.constant 1 : i32
    %c8_i32_71 = arith.constant 8 : i32
    %226 = arith.muli %c1_i32_70, %c8_i32_71 : i32
    %227 = tpu.assume_multiple %226, 8 : i32
    %228 = arith.index_cast %227 : i32 to index
    %c0_72 = arith.constant 0 : index
    %229 = vector.load %arg12[%228, %c0_72] : memref<64x128xf32, #tpu.memory_space<vmem>>, vector<8x128xf32>
    %cst_73 = arith.constant dense<0.000000e+00> : vector<8x128xf32>
    %230 = tpu.matmul %225, %202, %cst_73 {dimension_numbers = #tpu.dot_dimension_numbers<[1], [0], [0], [1], [0, 0, 1, 1], [], []>} : vector<8x32xf32>, vector<32x128xf32>, vector<8x128xf32> -> vector<8x128xf32>
    %231 = arith.addf %229, %230 : vector<8x128xf32>
    %232 = arith.negf %231 : vector<8x128xf32>
    %233 = math.exp %232 : vector<8x128xf32>
    %cst_74 = arith.constant 1.000000e+00 : f32
    %234 = vector.broadcast %cst_74 : f32 to vector<8x128xf32>
    %235 = arith.addf %234, %233 : vector<8x128xf32>
    %236 = arith.divf %234, %235 : vector<8x128xf32>
    %237 = math.tanh %231 : vector<8x128xf32>
    %238 = vector.extract_strided_slice %236 {offsets = [0, 0], sizes = [8, 32], strides = [1, 1]} : vector<8x128xf32> to vector<8x32xf32>
    %239 = vector.extract_strided_slice %236 {offsets = [0, 32], sizes = [8, 32], strides = [1, 1]} : vector<8x128xf32> to vector<8x32xf32>
    %240 = vector.extract_strided_slice %236 {offsets = [0, 96], sizes = [8, 32], strides = [1, 1]} : vector<8x128xf32> to vector<8x32xf32>
    %241 = vector.extract_strided_slice %237 {offsets = [0, 64], sizes = [8, 32], strides = [1, 1]} : vector<8x128xf32> to vector<8x32xf32>
    %242 = arith.mulf %239, %223 : vector<8x32xf32>
    %243 = arith.mulf %238, %241 : vector<8x32xf32>
    %244 = arith.addf %242, %243 : vector<8x32xf32>
    %245 = math.tanh %244 : vector<8x32xf32>
    %246 = arith.mulf %240, %245 : vector<8x32xf32>
    %c2_i32_75 = arith.constant 2 : i32
    %c8_i32_76 = arith.constant 8 : i32
    %247 = arith.muli %c2_i32_75, %c8_i32_76 : i32
    %248 = tpu.assume_multiple %247, 8 : i32
    %249 = arith.index_cast %248 : i32 to index
    %c0_77 = arith.constant 0 : index
    %250 = vector.load %arg12[%249, %c0_77] : memref<64x128xf32, #tpu.memory_space<vmem>>, vector<8x128xf32>
    %cst_78 = arith.constant dense<0.000000e+00> : vector<8x128xf32>
    %251 = tpu.matmul %246, %202, %cst_78 {dimension_numbers = #tpu.dot_dimension_numbers<[1], [0], [0], [1], [0, 0, 1, 1], [], []>} : vector<8x32xf32>, vector<32x128xf32>, vector<8x128xf32> -> vector<8x128xf32>
    %252 = arith.addf %250, %251 : vector<8x128xf32>
    %253 = arith.negf %252 : vector<8x128xf32>
    %254 = math.exp %253 : vector<8x128xf32>
    %cst_79 = arith.constant 1.000000e+00 : f32
    %255 = vector.broadcast %cst_79 : f32 to vector<8x128xf32>
    %256 = arith.addf %255, %254 : vector<8x128xf32>
    %257 = arith.divf %255, %256 : vector<8x128xf32>
    %258 = math.tanh %252 : vector<8x128xf32>
    %259 = vector.extract_strided_slice %257 {offsets = [0, 0], sizes = [8, 32], strides = [1, 1]} : vector<8x128xf32> to vector<8x32xf32>
    %260 = vector.extract_strided_slice %257 {offsets = [0, 32], sizes = [8, 32], strides = [1, 1]} : vector<8x128xf32> to vector<8x32xf32>
    %261 = vector.extract_strided_slice %257 {offsets = [0, 96], sizes = [8, 32], strides = [1, 1]} : vector<8x128xf32> to vector<8x32xf32>
    %262 = vector.extract_strided_slice %258 {offsets = [0, 64], sizes = [8, 32], strides = [1, 1]} : vector<8x128xf32> to vector<8x32xf32>
    %263 = arith.mulf %260, %244 : vector<8x32xf32>
    %264 = arith.mulf %259, %262 : vector<8x32xf32>
    %265 = arith.addf %263, %264 : vector<8x32xf32>
    %266 = math.tanh %265 : vector<8x32xf32>
    %267 = arith.mulf %261, %266 : vector<8x32xf32>
    %c3_i32_80 = arith.constant 3 : i32
    %c8_i32_81 = arith.constant 8 : i32
    %268 = arith.muli %c3_i32_80, %c8_i32_81 : i32
    %269 = tpu.assume_multiple %268, 8 : i32
    %270 = arith.index_cast %269 : i32 to index
    %c0_82 = arith.constant 0 : index
    %271 = vector.load %arg12[%270, %c0_82] : memref<64x128xf32, #tpu.memory_space<vmem>>, vector<8x128xf32>
    %cst_83 = arith.constant dense<0.000000e+00> : vector<8x128xf32>
    %272 = tpu.matmul %267, %202, %cst_83 {dimension_numbers = #tpu.dot_dimension_numbers<[1], [0], [0], [1], [0, 0, 1, 1], [], []>} : vector<8x32xf32>, vector<32x128xf32>, vector<8x128xf32> -> vector<8x128xf32>
    %273 = arith.addf %271, %272 : vector<8x128xf32>
    %274 = arith.negf %273 : vector<8x128xf32>
    %275 = math.exp %274 : vector<8x128xf32>
    %cst_84 = arith.constant 1.000000e+00 : f32
    %276 = vector.broadcast %cst_84 : f32 to vector<8x128xf32>
    %277 = arith.addf %276, %275 : vector<8x128xf32>
    %278 = arith.divf %276, %277 : vector<8x128xf32>
    %279 = math.tanh %273 : vector<8x128xf32>
    %280 = vector.extract_strided_slice %278 {offsets = [0, 0], sizes = [8, 32], strides = [1, 1]} : vector<8x128xf32> to vector<8x32xf32>
    %281 = vector.extract_strided_slice %278 {offsets = [0, 32], sizes = [8, 32], strides = [1, 1]} : vector<8x128xf32> to vector<8x32xf32>
    %282 = vector.extract_strided_slice %278 {offsets = [0, 96], sizes = [8, 32], strides = [1, 1]} : vector<8x128xf32> to vector<8x32xf32>
    %283 = vector.extract_strided_slice %279 {offsets = [0, 64], sizes = [8, 32], strides = [1, 1]} : vector<8x128xf32> to vector<8x32xf32>
    %284 = arith.mulf %281, %265 : vector<8x32xf32>
    %285 = arith.mulf %280, %283 : vector<8x32xf32>
    %286 = arith.addf %284, %285 : vector<8x32xf32>
    %287 = math.tanh %286 : vector<8x32xf32>
    %288 = arith.mulf %282, %287 : vector<8x32xf32>
    %c4_i32_85 = arith.constant 4 : i32
    %c8_i32_86 = arith.constant 8 : i32
    %289 = arith.muli %c4_i32_85, %c8_i32_86 : i32
    %290 = tpu.assume_multiple %289, 8 : i32
    %291 = arith.index_cast %290 : i32 to index
    %c0_87 = arith.constant 0 : index
    %292 = vector.load %arg12[%291, %c0_87] : memref<64x128xf32, #tpu.memory_space<vmem>>, vector<8x128xf32>
    %cst_88 = arith.constant dense<0.000000e+00> : vector<8x128xf32>
    %293 = tpu.matmul %288, %202, %cst_88 {dimension_numbers = #tpu.dot_dimension_numbers<[1], [0], [0], [1], [0, 0, 1, 1], [], []>} : vector<8x32xf32>, vector<32x128xf32>, vector<8x128xf32> -> vector<8x128xf32>
    %294 = arith.addf %292, %293 : vector<8x128xf32>
    %295 = arith.negf %294 : vector<8x128xf32>
    %296 = math.exp %295 : vector<8x128xf32>
    %cst_89 = arith.constant 1.000000e+00 : f32
    %297 = vector.broadcast %cst_89 : f32 to vector<8x128xf32>
    %298 = arith.addf %297, %296 : vector<8x128xf32>
    %299 = arith.divf %297, %298 : vector<8x128xf32>
    %300 = math.tanh %294 : vector<8x128xf32>
    %301 = vector.extract_strided_slice %299 {offsets = [0, 0], sizes = [8, 32], strides = [1, 1]} : vector<8x128xf32> to vector<8x32xf32>
    %302 = vector.extract_strided_slice %299 {offsets = [0, 32], sizes = [8, 32], strides = [1, 1]} : vector<8x128xf32> to vector<8x32xf32>
    %303 = vector.extract_strided_slice %299 {offsets = [0, 96], sizes = [8, 32], strides = [1, 1]} : vector<8x128xf32> to vector<8x32xf32>
    %304 = vector.extract_strided_slice %300 {offsets = [0, 64], sizes = [8, 32], strides = [1, 1]} : vector<8x128xf32> to vector<8x32xf32>
    %305 = arith.mulf %302, %286 : vector<8x32xf32>
    %306 = arith.mulf %301, %304 : vector<8x32xf32>
    %307 = arith.addf %305, %306 : vector<8x32xf32>
    %308 = math.tanh %307 : vector<8x32xf32>
    %309 = arith.mulf %303, %308 : vector<8x32xf32>
    %c5_i32_90 = arith.constant 5 : i32
    %c8_i32_91 = arith.constant 8 : i32
    %310 = arith.muli %c5_i32_90, %c8_i32_91 : i32
    %311 = tpu.assume_multiple %310, 8 : i32
    %312 = arith.index_cast %311 : i32 to index
    %c0_92 = arith.constant 0 : index
    %313 = vector.load %arg12[%312, %c0_92] : memref<64x128xf32, #tpu.memory_space<vmem>>, vector<8x128xf32>
    %cst_93 = arith.constant dense<0.000000e+00> : vector<8x128xf32>
    %314 = tpu.matmul %309, %202, %cst_93 {dimension_numbers = #tpu.dot_dimension_numbers<[1], [0], [0], [1], [0, 0, 1, 1], [], []>} : vector<8x32xf32>, vector<32x128xf32>, vector<8x128xf32> -> vector<8x128xf32>
    %315 = arith.addf %313, %314 : vector<8x128xf32>
    %316 = arith.negf %315 : vector<8x128xf32>
    %317 = math.exp %316 : vector<8x128xf32>
    %cst_94 = arith.constant 1.000000e+00 : f32
    %318 = vector.broadcast %cst_94 : f32 to vector<8x128xf32>
    %319 = arith.addf %318, %317 : vector<8x128xf32>
    %320 = arith.divf %318, %319 : vector<8x128xf32>
    %321 = math.tanh %315 : vector<8x128xf32>
    %322 = vector.extract_strided_slice %320 {offsets = [0, 0], sizes = [8, 32], strides = [1, 1]} : vector<8x128xf32> to vector<8x32xf32>
    %323 = vector.extract_strided_slice %320 {offsets = [0, 32], sizes = [8, 32], strides = [1, 1]} : vector<8x128xf32> to vector<8x32xf32>
    %324 = vector.extract_strided_slice %320 {offsets = [0, 96], sizes = [8, 32], strides = [1, 1]} : vector<8x128xf32> to vector<8x32xf32>
    %325 = vector.extract_strided_slice %321 {offsets = [0, 64], sizes = [8, 32], strides = [1, 1]} : vector<8x128xf32> to vector<8x32xf32>
    %326 = arith.mulf %323, %307 : vector<8x32xf32>
    %327 = arith.mulf %322, %325 : vector<8x32xf32>
    %328 = arith.addf %326, %327 : vector<8x32xf32>
    %329 = math.tanh %328 : vector<8x32xf32>
    %330 = arith.mulf %324, %329 : vector<8x32xf32>
    %c6_i32_95 = arith.constant 6 : i32
    %c8_i32_96 = arith.constant 8 : i32
    %331 = arith.muli %c6_i32_95, %c8_i32_96 : i32
    %332 = tpu.assume_multiple %331, 8 : i32
    %333 = arith.index_cast %332 : i32 to index
    %c0_97 = arith.constant 0 : index
    %334 = vector.load %arg12[%333, %c0_97] : memref<64x128xf32, #tpu.memory_space<vmem>>, vector<8x128xf32>
    %cst_98 = arith.constant dense<0.000000e+00> : vector<8x128xf32>
    %335 = tpu.matmul %330, %202, %cst_98 {dimension_numbers = #tpu.dot_dimension_numbers<[1], [0], [0], [1], [0, 0, 1, 1], [], []>} : vector<8x32xf32>, vector<32x128xf32>, vector<8x128xf32> -> vector<8x128xf32>
    %336 = arith.addf %334, %335 : vector<8x128xf32>
    %337 = arith.negf %336 : vector<8x128xf32>
    %338 = math.exp %337 : vector<8x128xf32>
    %cst_99 = arith.constant 1.000000e+00 : f32
    %339 = vector.broadcast %cst_99 : f32 to vector<8x128xf32>
    %340 = arith.addf %339, %338 : vector<8x128xf32>
    %341 = arith.divf %339, %340 : vector<8x128xf32>
    %342 = math.tanh %336 : vector<8x128xf32>
    %343 = vector.extract_strided_slice %341 {offsets = [0, 0], sizes = [8, 32], strides = [1, 1]} : vector<8x128xf32> to vector<8x32xf32>
    %344 = vector.extract_strided_slice %341 {offsets = [0, 32], sizes = [8, 32], strides = [1, 1]} : vector<8x128xf32> to vector<8x32xf32>
    %345 = vector.extract_strided_slice %341 {offsets = [0, 96], sizes = [8, 32], strides = [1, 1]} : vector<8x128xf32> to vector<8x32xf32>
    %346 = vector.extract_strided_slice %342 {offsets = [0, 64], sizes = [8, 32], strides = [1, 1]} : vector<8x128xf32> to vector<8x32xf32>
    %347 = arith.mulf %344, %328 : vector<8x32xf32>
    %348 = arith.mulf %343, %346 : vector<8x32xf32>
    %349 = arith.addf %347, %348 : vector<8x32xf32>
    %350 = math.tanh %349 : vector<8x32xf32>
    %351 = arith.mulf %345, %350 : vector<8x32xf32>
    %c7_i32_100 = arith.constant 7 : i32
    %c8_i32_101 = arith.constant 8 : i32
    %352 = arith.muli %c7_i32_100, %c8_i32_101 : i32
    %353 = tpu.assume_multiple %352, 8 : i32
    %354 = arith.index_cast %353 : i32 to index
    %c0_102 = arith.constant 0 : index
    %355 = vector.load %arg12[%354, %c0_102] : memref<64x128xf32, #tpu.memory_space<vmem>>, vector<8x128xf32>
    %cst_103 = arith.constant dense<0.000000e+00> : vector<8x128xf32>
    %356 = tpu.matmul %351, %202, %cst_103 {dimension_numbers = #tpu.dot_dimension_numbers<[1], [0], [0], [1], [0, 0, 1, 1], [], []>} : vector<8x32xf32>, vector<32x128xf32>, vector<8x128xf32> -> vector<8x128xf32>
    %357 = arith.addf %355, %356 : vector<8x128xf32>
    %358 = arith.negf %357 : vector<8x128xf32>
    %359 = math.exp %358 : vector<8x128xf32>
    %cst_104 = arith.constant 1.000000e+00 : f32
    %360 = vector.broadcast %cst_104 : f32 to vector<8x128xf32>
    %361 = arith.addf %360, %359 : vector<8x128xf32>
    %362 = arith.divf %360, %361 : vector<8x128xf32>
    %363 = math.tanh %357 : vector<8x128xf32>
    %364 = vector.extract_strided_slice %362 {offsets = [0, 0], sizes = [8, 32], strides = [1, 1]} : vector<8x128xf32> to vector<8x32xf32>
    %365 = vector.extract_strided_slice %362 {offsets = [0, 32], sizes = [8, 32], strides = [1, 1]} : vector<8x128xf32> to vector<8x32xf32>
    %366 = vector.extract_strided_slice %362 {offsets = [0, 96], sizes = [8, 32], strides = [1, 1]} : vector<8x128xf32> to vector<8x32xf32>
    %367 = vector.extract_strided_slice %363 {offsets = [0, 64], sizes = [8, 32], strides = [1, 1]} : vector<8x128xf32> to vector<8x32xf32>
    %368 = arith.mulf %365, %349 : vector<8x32xf32>
    %369 = arith.mulf %364, %367 : vector<8x32xf32>
    %370 = arith.addf %368, %369 : vector<8x32xf32>
    %371 = math.tanh %370 : vector<8x32xf32>
    %372 = arith.mulf %366, %371 : vector<8x32xf32>
    %c8_i32_105 = arith.constant 8 : i32
    %c0_106 = arith.constant 0 : index
    %c0_107 = arith.constant 0 : index
    %373 = vector.load %arg8[%c0_106, %c0_107] : memref<32x1xf32, #tpu.memory_space<vmem>>, vector<32x1xf32>
    %cst_108 = arith.constant dense<0.000000e+00> : vector<8x1xf32>
    %374 = tpu.matmul %372, %373, %cst_108 {dimension_numbers = #tpu.dot_dimension_numbers<[1], [0], [0], [1], [0, 0, 1, 1], [], []>} : vector<8x32xf32>, vector<32x1xf32>, vector<8x1xf32> -> vector<8x1xf32>
    %c0_109 = arith.constant 0 : index
    %c0_110 = arith.constant 0 : index
    %375 = vector.load %arg9[%c0_109, %c0_110] : memref<1x1xf32, #tpu.memory_space<vmem>>, vector<1x1xf32>
    %376 = vector.broadcast %375 : vector<1x1xf32> to vector<8x1xf32>
    %377 = arith.addf %374, %376 : vector<8x1xf32>
    %c0_111 = arith.constant 0 : index
    %c0_112 = arith.constant 0 : index
    %378 = vector.load %arg10[%c0_111, %c0_112] : memref<8x1xf32, #tpu.memory_space<vmem>>, vector<8x1xf32>
    tpu.vector_store %arg10[%c0_111, %c0_112], %377 {strides = array<i32>} : memref<8x1xf32, #tpu.memory_space<vmem>>, vector<8x1xf32>,
    return
  }
  func.func @transform_0(%arg0: i32) -> (i32, i32, i32) {
    %c0_i32 = arith.constant 0 : i32
    %c0_i32_0 = arith.constant 0 : i32
    %c0_i32_1 = arith.constant 0 : i32
    return %arg0, %c0_i32, %c0_i32_0 : i32, i32, i32
  }
  func.func @transform_1(%arg0: i32) -> (i32, i32) {
    %c0_i32 = arith.constant 0 : i32
    %c0_i32_0 = arith.constant 0 : i32
    %c0_i32_1 = arith.constant 0 : i32
    return %c0_i32, %c0_i32_0 : i32, i32
  }
  func.func @transform_2(%arg0: i32) -> (i32, i32) {
    %c0_i32 = arith.constant 0 : i32
    %c0_i32_0 = arith.constant 0 : i32
    %c0_i32_1 = arith.constant 0 : i32
    return %c0_i32, %c0_i32_0 : i32, i32
  }
  func.func @transform_3(%arg0: i32) -> (i32, i32) {
    %c0_i32 = arith.constant 0 : i32
    %c0_i32_0 = arith.constant 0 : i32
    %c0_i32_1 = arith.constant 0 : i32
    return %c0_i32, %c0_i32_0 : i32, i32
  }
  func.func @transform_4(%arg0: i32) -> (i32, i32) {
    %c0_i32 = arith.constant 0 : i32
    %c0_i32_0 = arith.constant 0 : i32
    %c0_i32_1 = arith.constant 0 : i32
    return %c0_i32, %c0_i32_0 : i32, i32
  }
  func.func @transform_5(%arg0: i32) -> (i32, i32) {
    %c0_i32 = arith.constant 0 : i32
    %c0_i32_0 = arith.constant 0 : i32
    %c0_i32_1 = arith.constant 0 : i32
    return %c0_i32, %c0_i32_0 : i32, i32
  }
  func.func @transform_6(%arg0: i32) -> (i32, i32) {
    %c0_i32 = arith.constant 0 : i32
    %c0_i32_0 = arith.constant 0 : i32
    %c0_i32_1 = arith.constant 0 : i32
    return %c0_i32, %c0_i32_0 : i32, i32
  }
  func.func @transform_7(%arg0: i32) -> (i32, i32) {
    %c0_i32 = arith.constant 0 : i32
    %c0_i32_0 = arith.constant 0 : i32
    %c0_i32_1 = arith.constant 0 : i32
    return %c0_i32, %c0_i32_0 : i32, i32
  }
  func.func @transform_8(%arg0: i32) -> (i32, i32) {
    %c0_i32 = arith.constant 0 : i32
    %c0_i32_0 = arith.constant 0 : i32
    %c0_i32_1 = arith.constant 0 : i32
    return %c0_i32, %c0_i32_0 : i32, i32
  }
  func.func @transform_9(%arg0: i32) -> (i32, i32) {
    %c0_i32 = arith.constant 0 : i32
    %c0_i32_0 = arith.constant 0 : i32
    return %arg0, %c0_i32 : i32, i32
  }
}

</mosaic_0001>

<llo_original>
// kernel: tpu_custom_call.1
$region0: #{tpu_custom_call.1}
  #allocation0 [shape = 'u32[]', space=smem, size = 0x4, offset = 0x4, fixed_abs, tag = 'smem constant byte address 0x4 - core index']
  #allocation1 [shape = 'u32[144,128]{1,0:T(1,128)}', space=vmem, size = 0x12000, scoped, tag = 'internal scratch']
  #allocation2 [shape = 'f32[64,32]{1,0:T(8,128)}', space=vmem, size = 0x8000, scoped, tag = 'scratch operand']
  #allocation3 [shape = 'f32[64,128]{1,0:T(8,128)}', space=vmem, size = 0x8000, scoped, tag = 'scratch operand']
  #allocation4 [shape = 'f32[1,1]{1,0:T(1,128)S(1)}', space=vmem, size = 0x200, scoped, tag = 'scoped memory for tpu_custom_call.1']
  %s0 = inlined_call_operand.vmem [shape: f32[1,64,8], index: 0, kind: input, shape index: {}]
  %s1 = inlined_call_operand.hbm [shape: f32[8,128], index: 1, kind: input, shape index: {}]
  %s2 = inlined_call_operand.vmem [shape: f32[32,128], index: 2, kind: input, shape index: {}]
  %s3 = inlined_call_operand.vmem [shape: f32[1,128], index: 3, kind: input, shape index: {}]
  %s4 = inlined_call_operand.vmem [shape: f32[32,128], index: 4, kind: input, shape index: {}]
  %s5 = inlined_call_operand.vmem [shape: f32[32,128], index: 5, kind: input, shape index: {}]
  %s6 = inlined_call_operand.vmem [shape: f32[1,128], index: 6, kind: input, shape index: {}]
  %s7 = inlined_call_operand.vmem [shape: f32[32,1], index: 7, kind: input, shape index: {}]
  %s8 = inlined_call_operand.<no memory space> [shape: f32[1,1], index: 8, kind: input, shape index: {}]
  %s9 = inlined_call_operand.vmem [shape: f32[8,1], index: 9, kind: output, shape index: {}]
  %s10 = sld [smem:[#allocation0]]
  $region50: #{tpu_custom_call.1} parent=0
    _
  %s12 = ssub.s32 1, %s10
  %s13 = scalar_select 0, %s12, %s10
  %v14 = vstv %s8
  %15 = vst [vmem:[#allocation4] sm:$0x1] %v14
  $region1: #{tpu_custom_call.1} parent=0
    #allocation5 [shape = 'u8[4096]{0}', space=vmem, size = 0x1000, scoped, tag = 'input window, operand 1, single buffered']
    #allocation6 [shape = 's32[1]{0}', space=sflag, size = 0x4, scoped, tag = 'scoped memory for tpu_custom_call.1']
    %16 = vsyncpa [#allocation6], 0
    // Predicated region
    $region2: #{tpu_custom_call.1} parent=1 // pred_check
      _
    $region3: #{tpu_custom_call.1} parent=1 // pred_check_branch
      %18 = sbr.rel (0) target = $region5
    $region4: #{tpu_custom_call.1} parent=1 // pred_region
      _
    $region5: #{tpu_custom_call.1} parent=1 // pred_fallthru
      _
    // Predicated region
    $region6: #{tpu_custom_call.1} parent=1 // pred_check
      _
    $region7: #{tpu_custom_call.1} parent=1 // pred_check_branch
      %20 = sbr.rel (0) target = $region9
    $region8: #{tpu_custom_call.1} parent=1 // pred_region
      %s22 = ssub.s32 128, 128
      %23 = vsyncadd [#allocation6], %s22
      %s25 = sshll.u32 [#allocation5], 4
      %s26 = int_to_ptr.vmem [resolvable:$true] %s25
      %28 = dma.hbm_to_vmem [thread:$0]  %s1, 128, %s26, [#allocation6]
    $region9: #{tpu_custom_call.1} parent=1 // pred_fallthru
      _
    // Predicated region
    $region10: #{tpu_custom_call.1} parent=1 // pred_check
      _
    $region11: #{tpu_custom_call.1} parent=1 // pred_check_branch
      %30 = sbr.rel (0) target = $region13
    $region12: #{tpu_custom_call.1} parent=1 // pred_region
      _
    $region13: #{tpu_custom_call.1} parent=1 // pred_fallthru
      _
    // Predicated region
    $region14: #{tpu_custom_call.1} parent=1 // pred_check
      _
    $region15: #{tpu_custom_call.1} parent=1 // pred_check_branch
      %32 = sbr.rel (0) target = $region17
    $region16: #{tpu_custom_call.1} parent=1 // pred_region
      _
    $region17: #{tpu_custom_call.1} parent=1 // pred_fallthru
      _
    // Predicated region
    $region18: #{tpu_custom_call.1} parent=1 // pred_check
      _
    $region19: #{tpu_custom_call.1} parent=1 // pred_check_branch
      %34 = sbr.rel (0) target = $region21
    $region20: #{tpu_custom_call.1} parent=1 // pred_region
      _
    $region21: #{tpu_custom_call.1} parent=1 // pred_fallthru
      _
    // Predicated region
    $region22: #{tpu_custom_call.1} parent=1 // pred_check
      _
    $region23: #{tpu_custom_call.1} parent=1 // pred_check_branch
      %36 = sbr.rel (0) target = $region25
    $region24: #{tpu_custom_call.1} parent=1 // pred_region
      _
    $region25: #{tpu_custom_call.1} parent=1 // pred_fallthru
      _
    // Predicated region
    $region26: #{tpu_custom_call.1} parent=1 // pred_check
      _
    $region27: #{tpu_custom_call.1} parent=1 // pred_check_branch
      %38 = sbr.rel (0) target = $region29
    $region28: #{tpu_custom_call.1} parent=1 // pred_region
      _
    $region29: #{tpu_custom_call.1} parent=1 // pred_fallthru
      _
    // Predicated region
    $region30: #{tpu_custom_call.1} parent=1 // pred_check
      _
    $region31: #{tpu_custom_call.1} parent=1 // pred_check_branch
      %40 = sbr.rel (0) target = $region33
    $region32: #{tpu_custom_call.1} parent=1 // pred_region
      _
    $region33: #{tpu_custom_call.1} parent=1 // pred_fallthru
      _
    // Predicated region
    $region34: #{tpu_custom_call.1} parent=1 // pred_check
      _
    $region35: #{tpu_custom_call.1} parent=1 // pred_check_branch
      %42 = sbr.rel (0) target = $region37
    $region36: #{tpu_custom_call.1} parent=1 // pred_region
      _
    $region37: #{tpu_custom_call.1} parent=1 // pred_fallthru
      _
    // Predicated region
    $region38: #{tpu_custom_call.1} parent=1 // pred_check
      _
    $region39: #{tpu_custom_call.1} parent=1 // pred_check_branch
      %44 = sbr.rel (0) target = $region41
    $region40: #{tpu_custom_call.1} parent=1 // pred_region
      %45 = dma.done [#allocation6], 128
    $region41: #{tpu_custom_call.1} parent=1 // pred_fallthru
      _
    %v46 = vld [vmem:[#allocation5] sm:$0xff]
    %v47 = vld [vmem:[%s0] sm:$0xff]
    %v48 = vld [vmem:[%s0 + $0x8] sm:$0xff]
    %v49 = vld [vmem:[%s0 + $0x10] sm:$0xff]
    %v50 = vld [vmem:[%s0 + $0x18] sm:$0xff]
    %v51 = vld [vmem:[%s0 + $0x20] sm:$0xff]
    %v52 = vld [vmem:[%s0 + $0x28] sm:$0xff]
    %v53 = vld [vmem:[%s0 + $0x30] sm:$0xff]
    %v54 = vld [vmem:[%s0 + $0x38] sm:$0xff]
    %v55 = vld [vmem:[%s3] sm:$0x1]
    %v57 = vlaneseq
    %v58 = vshrl.u32 %v57, 7
    %v59 = vsub.s32 0, %v58
    %v60 = vrot.slane %v55, %v59
    %vm62 = vcmask 64512
    %v64 = vsel %vm62, %v47, 0
    %v67 = vsel %vm62, %v48, 0
    %v70 = vsel %vm62, %v49, 0
    %v73 = vsel %vm62, %v50, 0
    %v76 = vsel %vm62, %v51, 0
    %v79 = vsel %vm62, %v52, 0
    %v82 = vsel %vm62, %v53, 0
    %v85 = vsel %vm62, %v54, 0
    %87 = vmatprep.subr.mxu0 0.0
    %88 = vmatpush1.msra.mxu0 0.0
    %89 = vmatprep.subr.mxu0 0.0
    %90 = vmatpush1.msra.mxu0 0.0
    %91 = vmatprep.subr.mxu0 0.0
    %92 = vmatpush1.msra.mxu0 0.0
    %93 = vmatprep.subr.mxu0 0.0
    %94 = vmatpush1.msra.mxu0 0.0
    %95 = vmatprep.subr.mxu0 0.0
    %96 = vmatpush1.msra.mxu0 0.0
    %97 = vmatprep.subr.mxu0 0.0
    %98 = vmatpush1.msra.mxu0 0.0
    %99 = vmatprep.subr.mxu0 0.0
    %100 = vmatpush1.msra.mxu0 0.0
    %101 = vmatprep.subr.mxu0 0.0
    %102 = vmatpush1.msra.mxu0 0.0
    %103 = vmatprep.subr.mxu0 0.0
    %104 = vmatpush1.msra.mxu0 0.0
    %105 = vmatprep.subr.mxu0 0.0
    %106 = vmatpush1.msra.mxu0 0.0
    %107 = vmatprep.subr.mxu0 0.0
    %108 = vmatpush1.msra.mxu0 0.0
    %109 = vmatprep.subr.mxu0 0.0
    %110 = vmatpush1.msra.mxu0 0.0
    %111 = vmatprep.subr.mxu0 0.0
    %112 = vmatpush1.msra.mxu0 0.0
    %113 = vmatprep.subr.mxu0 0.0
    %114 = vmatpush1.msra.mxu0 0.0
    %115 = vmatprep.subr.mxu0 0.0
    %116 = vmatpush1.msra.mxu0 0.0
    %117 = vmatprep.subr.mxu0 0.0
    %118 = vmatpush1.msra.mxu0 %v46
    %119 = vmatprep.subr.mxu0 0.0
    %120 = vmatpush2.msra.mxu0 0.0
    %121 = vmatprep.subr.mxu0 0.0
    %122 = vmatpush2.msra.mxu0 0.0
    %123 = vmatprep.subr.mxu0 0.0
    %124 = vmatpush2.msra.mxu0 0.0
    %125 = vmatprep.subr.mxu0 0.0
    %126 = vmatpush2.msra.mxu0 0.0
    %127 = vmatprep.subr.mxu0 0.0
    %128 = vmatpush2.msra.mxu0 0.0
    %129 = vmatprep.subr.mxu0 0.0
    %130 = vmatpush2.msra.mxu0 0.0
    %131 = vmatprep.subr.mxu0 0.0
    %132 = vmatpush2.msra.mxu0 0.0
    %133 = vmatprep.subr.mxu0 0.0
    %134 = vmatpush2.msra.mxu0 0.0
    %135 = vmatprep.subr.mxu0 0.0
    %136 = vmatpush2.msra.mxu0 0.0
    %137 = vmatprep.subr.mxu0 0.0
    %138 = vmatpush2.msra.mxu0 0.0
    %139 = vmatprep.subr.mxu0 0.0
    %140 = vmatpush2.msra.mxu0 0.0
    %141 = vmatprep.subr.mxu0 0.0
    %142 = vmatpush2.msra.mxu0 0.0
    %143 = vmatprep.subr.mxu0 0.0
    %144 = vmatpush2.msra.mxu0 0.0
    %145 = vmatprep.subr.mxu0 0.0
    %146 = vmatpush2.msra.mxu0 0.0
    %147 = vmatprep.subr.mxu0 0.0
    %148 = vmatpush2.msra.mxu0 0.0
    %149 = vmatprep.subr.mxu0 0.0
    %150 = vmatpush2.msra.mxu0 0.0
    %151 = vmatprep.mubr.f32.mxu0 0.0
    %152 = vmatmul.mubr.f32.gmra.mxu0 %v64
    %v153 = vpop.f32.mrf.mxu0
    %v154 = vadd.f32 %v60, %v153
    %v155 = vpop.f32.mrf.mxu0
    %156 = vmatprep.mubr.f32.mxu0 0.0
    %157 = vmatmul.mubr.f32.gmra.mxu0 %v67
    %v158 = vpop.f32.mrf.mxu0
    %v159 = vadd.f32 %v60, %v158
    %v160 = vpop.f32.mrf.mxu0
    %161 = vmatprep.mubr.f32.mxu0 0.0
    %162 = vmatmul.mubr.f32.gmra.mxu0 %v70
    %v163 = vpop.f32.mrf.mxu0
    %v164 = vadd.f32 %v60, %v163
    %v165 = vpop.f32.mrf.mxu0
    %166 = vmatprep.mubr.f32.mxu0 0.0
    %167 = vmatmul.mubr.f32.gmra.mxu0 %v73
    %v168 = vpop.f32.mrf.mxu0
    %v169 = vadd.f32 %v60, %v168
    %v170 = vpop.f32.mrf.mxu0
    %171 = vmatprep.mubr.f32.mxu0 0.0
    %172 = vmatmul.mubr.f32.gmra.mxu0 %v76
    %v173 = vpop.f32.mrf.mxu0
    %v174 = vadd.f32 %v60, %v173
    %v175 = vpop.f32.mrf.mxu0
    %176 = vmatprep.mubr.f32.mxu0 0.0
    %177 = vmatmul.mubr.f32.gmra.mxu0 %v79
    %v178 = vpop.f32.mrf.mxu0
    %v179 = vadd.f32 %v60, %v178
    %v180 = vpop.f32.mrf.mxu0
    %181 = vmatprep.mubr.f32.mxu0 0.0
    %182 = vmatmul.mubr.f32.gmra.mxu0 %v82
    %v183 = vpop.f32.mrf.mxu0
    %v184 = vadd.f32 %v60, %v183
    %v185 = vpop.f32.mrf.mxu0
    %186 = vmatprep.mubr.f32.mxu0 0.0
    %187 = vmatmul.mubr.f32.gmra.mxu0 %v85
    %v188 = vpop.f32.mrf.mxu0
    %v189 = vadd.f32 %v60, %v188
    %v190 = vpop.f32.mrf.mxu0
    %191 = vdwg.mxu0
    %192 = vst [vmem:[#allocation3] sm:$0xff] %v154
    %193 = vst [vmem:[#allocation3 + $0x8] sm:$0xff] %v159
    %194 = vst [vmem:[#allocation3 + $0x10] sm:$0xff] %v164
    %195 = vst [vmem:[#allocation3 + $0x18] sm:$0xff] %v169
    %196 = vst [vmem:[#allocation3 + $0x20] sm:$0xff] %v174
    %197 = vst [vmem:[#allocation3 + $0x28] sm:$0xff] %v179
    %198 = vst [vmem:[#allocation3 + $0x30] sm:$0xff] %v184
    %199 = vst [vmem:[#allocation3 + $0x38] sm:$0xff] %v189
    %v200 = vld [vmem:[%s2] sm:$0xff]
    %v201 = vld [vmem:[%s2 + $0x8] sm:$0xff]
    %v202 = vld [vmem:[%s2 + $0x10] sm:$0xff]
    %v203 = vld [vmem:[%s2 + $0x18] sm:$0xff]
    %v204 = vld [vmem:[#allocation3] sm:$0xff]
    %vm205 = vcmask 261120
    %v207 = vsel %vm205, 0.0, 0
    %209 = vmatprep.subr.mxu0 0.0
    %210 = vmatpush1.msra.mxu0 0.0
    %211 = vmatprep.subr.mxu0 0.0
    %212 = vmatpush1.msra.mxu0 0.0
    %213 = vmatprep.subr.mxu0 0.0
    %214 = vmatpush1.msra.mxu0 0.0
    %215 = vmatprep.subr.mxu0 0.0
    %216 = vmatpush1.msra.mxu0 0.0
    %217 = vmatprep.subr.mxu0 0.0
    %218 = vmatpush1.msra.mxu0 0.0
    %219 = vmatprep.subr.mxu0 0.0
    %220 = vmatpush1.msra.mxu0 0.0
    %221 = vmatprep.subr.mxu0 0.0
    %222 = vmatpush1.msra.mxu0 0.0
    %223 = vmatprep.subr.mxu0 0.0
    %224 = vmatpush1.msra.mxu0 0.0
    %225 = vmatprep.subr.mxu0 0.0
    %226 = vmatpush1.msra.mxu0 0.0
    %227 = vmatprep.subr.mxu0 0.0
    %228 = vmatpush1.msra.mxu0 0.0
    %229 = vmatprep.subr.mxu0 0.0
    %230 = vmatpush1.msra.mxu0 0.0
    %231 = vmatprep.subr.mxu0 0.0
    %232 = vmatpush1.msra.mxu0 0.0
    %233 = vmatprep.subr.mxu0 0.0
    %234 = vmatpush1.msra.mxu0 %v203
    %235 = vmatprep.subr.mxu0 0.0
    %236 = vmatpush1.msra.mxu0 %v202
    %237 = vmatprep.subr.mxu0 0.0
    %238 = vmatpush1.msra.mxu0 %v201
    %239 = vmatprep.subr.mxu0 0.0
    %240 = vmatpush1.msra.mxu0 %v200
    %241 = vmatprep.subr.mxu0 0.0
    %242 = vmatpush2.msra.mxu0 0.0
    %243 = vmatprep.subr.mxu0 0.0
    %244 = vmatpush2.msra.mxu0 0.0
    %245 = vmatprep.subr.mxu0 0.0
    %246 = vmatpush2.msra.mxu0 0.0
    %247 = vmatprep.subr.mxu0 0.0
    %248 = vmatpush2.msra.mxu0 0.0
    %249 = vmatprep.subr.mxu0 0.0
    %250 = vmatpush2.msra.mxu0 0.0
    %251 = vmatprep.subr.mxu0 0.0
    %252 = vmatpush2.msra.mxu0 0.0
    %253 = vmatprep.subr.mxu0 0.0
    %254 = vmatpush2.msra.mxu0 0.0
    %255 = vmatprep.subr.mxu0 0.0
    %256 = vmatpush2.msra.mxu0 0.0
    %257 = vmatprep.subr.mxu0 0.0
    %258 = vmatpush2.msra.mxu0 0.0
    %259 = vmatprep.subr.mxu0 0.0
    %260 = vmatpush2.msra.mxu0 0.0
    %261 = vmatprep.subr.mxu0 0.0
    %262 = vmatpush2.msra.mxu0 0.0
    %263 = vmatprep.subr.mxu0 0.0
    %264 = vmatpush2.msra.mxu0 0.0
    %265 = vmatprep.subr.mxu0 0.0
    %266 = vmatpush2.msra.mxu0 0.0
    %267 = vmatprep.subr.mxu0 0.0
    %268 = vmatpush2.msra.mxu0 0.0
    %269 = vmatprep.subr.mxu0 0.0
    %270 = vmatpush2.msra.mxu0 0.0
    %271 = vmatprep.subr.mxu0 0.0
    %272 = vmatpush2.msra.mxu0 0.0
    %273 = vmatprep.mubr.f32.mxu0 0.0
    %274 = vmatmul.mubr.f32.gmra.mxu0 %v207
    %v275 = vpop.f32.mrf.mxu0
    %v276 = vadd.f32 0.0, %v275
    %v277 = vpop.f32.mrf.mxu0
    %278 = vdwg.mxu0
    %v279 = vadd.f32 %v204, %v276
    %v280 = vxor.u32 %v279, 2147483648
    %v281 = vmul.f32 %v280, 1.442695
    %v282 = vpow.pop %v281
    %v283 = vadd.f32 %v282, 1.0
    %v284 = vrcp.pop %v283
    %v285 = vmul.f32 1.0, %v284
    %v286 = vtanh.pop %v279
    %v287 = vmul.f32 %v285, 0.0
    %289 = vrot.lane.b32.xlu0 %v286, 64
    %v290 = vpop.permute.xlu0 %289
    %v292 = vmul.f32 %v285, %v290
    %294 = vrot.lane.b32.xlu0 %v292, 32
    %v295 = vpop.permute.xlu0 %294
    %v297 = vadd.f32 %v287, %v295
    %v298 = vtanh.pop %v297
    %300 = vrot.lane.b32.xlu0 %v298, 64
    %v301 = vpop.permute.xlu0 %300
    %v303 = vmul.f32 %v285, %v301
    %305 = vrot.lane.b32.xlu0 %v303, 32
    %v306 = vpop.permute.xlu0 %305
    %308 = vst.msk [vmem:[#allocation2] sm:$0xff] %vm205, %v306
    %s309 = scalar_lea.vmem [#allocation3], 8
    %v310 = vld [vmem:[%s309] sm:$0xff]
    %v311 = vsel %vm205, %v306, 0
    %313 = vmatprep.subr.mxu0 0.0
    %314 = vmatpush1.msra.mxu0 0.0
    %315 = vmatprep.subr.mxu0 0.0
    %316 = vmatpush1.msra.mxu0 0.0
    %317 = vmatprep.subr.mxu0 0.0
    %318 = vmatpush1.msra.mxu0 0.0
    %319 = vmatprep.subr.mxu0 0.0
    %320 = vmatpush1.msra.mxu0 0.0
    %321 = vmatprep.subr.mxu0 0.0
    %322 = vmatpush1.msra.mxu0 0.0
    %323 = vmatprep.subr.mxu0 0.0
    %324 = vmatpush1.msra.mxu0 0.0
    %325 = vmatprep.subr.mxu0 0.0
    %326 = vmatpush1.msra.mxu0 0.0
    %327 = vmatprep.subr.mxu0 0.0
    %328 = vmatpush1.msra.mxu0 0.0
    %329 = vmatprep.subr.mxu0 0.0
    %330 = vmatpush1.msra.mxu0 0.0
    %331 = vmatprep.subr.mxu0 0.0
    %332 = vmatpush1.msra.mxu0 0.0
    %333 = vmatprep.subr.mxu0 0.0
    %334 = vmatpush1.msra.mxu0 0.0
    %335 = vmatprep.subr.mxu0 0.0
    %336 = vmatpush1.msra.mxu0 0.0
    %337 = vmatprep.subr.mxu0 0.0
    %338 = vmatpush1.msra.mxu0 %v203
    %339 = vmatprep.subr.mxu0 0.0
    %340 = vmatpush1.msra.mxu0 %v202
    %341 = vmatprep.subr.mxu0 0.0
    %342 = vmatpush1.msra.mxu0 %v201
    %343 = vmatprep.subr.mxu0 0.0
    %344 = vmatpush1.msra.mxu0 %v200
    %345 = vmatprep.subr.mxu0 0.0
    %346 = vmatpush2.msra.mxu0 0.0
    %347 = vmatprep.subr.mxu0 0.0
    %348 = vmatpush2.msra.mxu0 0.0
    %349 = vmatprep.subr.mxu0 0.0
    %350 = vmatpush2.msra.mxu0 0.0
    %351 = vmatprep.subr.mxu0 0.0
    %352 = vmatpush2.msra.mxu0 0.0
    %353 = vmatprep.subr.mxu0 0.0
    %354 = vmatpush2.msra.mxu0 0.0
    %355 = vmatprep.subr.mxu0 0.0
    %356 = vmatpush2.msra.mxu0 0.0
    %357 = vmatprep.subr.mxu0 0.0
    %358 = vmatpush2.msra.mxu0 0.0
    %359 = vmatprep.subr.mxu0 0.0
    %360 = vmatpush2.msra.mxu0 0.0
    %361 = vmatprep.subr.mxu0 0.0
    %362 = vmatpush2.msra.mxu0 0.0
    %363 = vmatprep.subr.mxu0 0.0
    %364 = vmatpush2.msra.mxu0 0.0
    %365 = vmatprep.subr.mxu0 0.0
    %366 = vmatpush2.msra.mxu0 0.0
    %367 = vmatprep.subr.mxu0 0.0
    %368 = vmatpush2.msra.mxu0 0.0
    %369 = vmatprep.subr.mxu0 0.0
    %370 = vmatpush2.msra.mxu0 0.0
    %371 = vmatprep.subr.mxu0 0.0
    %372 = vmatpush2.msra.mxu0 0.0
    %373 = vmatprep.subr.mxu0 0.0
    %374 = vmatpush2.msra.mxu0 0.0
    %375 = vmatprep.subr.mxu0 0.0
    %376 = vmatpush2.msra.mxu0 0.0
    %377 = vmatprep.mubr.f32.mxu0 0.0
    %378 = vmatmul.mubr.f32.gmra.mxu0 %v311
    %v379 = vpop.f32.mrf.mxu0
    %v380 = vadd.f32 0.0, %v379
    %v381 = vpop.f32.mrf.mxu0
    %382 = vdwg.mxu0
    %v383 = vadd.f32 %v310, %v380
    %v384 = vxor.u32 %v383, 2147483648
    %v385 = vmul.f32 %v384, 1.442695
    %v386 = vpow.pop %v385
    %v387 = vadd.f32 %v386, 1.0
    %v388 = vrcp.pop %v387
    %v389 = vmul.f32 1.0, %v388
    %v390 = vtanh.pop %v383
    %v391 = vmul.f32 %v389, %v297
    %393 = vrot.lane.b32.xlu0 %v390, 64
    %v394 = vpop.permute.xlu0 %393
    %v396 = vmul.f32 %v389, %v394
    %398 = vrot.lane.b32.xlu0 %v396, 32
    %v399 = vpop.permute.xlu0 %398
    %v401 = vadd.f32 %v391, %v399
    %v402 = vtanh.pop %v401
    %404 = vrot.lane.b32.xlu0 %v402, 64
    %v405 = vpop.permute.xlu0 %404
    %v407 = vmul.f32 %v389, %v405
    %409 = vrot.lane.b32.xlu0 %v407, 32
    %v410 = vpop.permute.xlu0 %409
    %s412 = scalar_lea.vmem [#allocation2], 8
    %413 = vst.msk [vmem:[%s412] sm:$0xff] %vm205, %v410
    %s414 = scalar_lea.vmem [#allocation3], 16
    %v415 = vld [vmem:[%s414] sm:$0xff]
    %v416 = vsel %vm205, %v410, 0
    %418 = vmatprep.subr.mxu0 0.0
    %419 = vmatpush1.msra.mxu0 0.0
    %420 = vmatprep.subr.mxu0 0.0
    %421 = vmatpush1.msra.mxu0 0.0
    %422 = vmatprep.subr.mxu0 0.0
    %423 = vmatpush1.msra.mxu0 0.0
    %424 = vmatprep.subr.mxu0 0.0
    %425 = vmatpush1.msra.mxu0 0.0
    %426 = vmatprep.subr.mxu0 0.0
    %427 = vmatpush1.msra.mxu0 0.0
    %428 = vmatprep.subr.mxu0 0.0
    %429 = vmatpush1.msra.mxu0 0.0
    %430 = vmatprep.subr.mxu0 0.0
    %431 = vmatpush1.msra.mxu0 0.0
    %432 = vmatprep.subr.mxu0 0.0
    %433 = vmatpush1.msra.mxu0 0.0
    %434 = vmatprep.subr.mxu0 0.0
    %435 = vmatpush1.msra.mxu0 0.0
    %436 = vmatprep.subr.mxu0 0.0
    %437 = vmatpush1.msra.mxu0 0.0
    %438 = vmatprep.subr.mxu0 0.0
    %439 = vmatpush1.msra.mxu0 0.0
    %440 = vmatprep.subr.mxu0 0.0
    %441 = vmatpush1.msra.mxu0 0.0
    %442 = vmatprep.subr.mxu0 0.0
    %443 = vmatpush1.msra.mxu0 %v203
    %444 = vmatprep.subr.mxu0 0.0
    %445 = vmatpush1.msra.mxu0 %v202
    %446 = vmatprep.subr.mxu0 0.0
    %447 = vmatpush1.msra.mxu0 %v201
    %448 = vmatprep.subr.mxu0 0.0
    %449 = vmatpush1.msra.mxu0 %v200
    %450 = vmatprep.subr.mxu0 0.0
    %451 = vmatpush2.msra.mxu0 0.0
    %452 = vmatprep.subr.mxu0 0.0
    %453 = vmatpush2.msra.mxu0 0.0
    %454 = vmatprep.subr.mxu0 0.0
    %455 = vmatpush2.msra.mxu0 0.0
    %456 = vmatprep.subr.mxu0 0.0
    %457 = vmatpush2.msra.mxu0 0.0
    %458 = vmatprep.subr.mxu0 0.0
    %459 = vmatpush2.msra.mxu0 0.0
    %460 = vmatprep.subr.mxu0 0.0
    %461 = vmatpush2.msra.mxu0 0.0
    %462 = vmatprep.subr.mxu0 0.0
    %463 = vmatpush2.msra.mxu0 0.0
    %464 = vmatprep.subr.mxu0 0.0
    %465 = vmatpush2.msra.mxu0 0.0
    %466 = vmatprep.subr.mxu0 0.0
    %467 = vmatpush2.msra.mxu0 0.0
    %468 = vmatprep.subr.mxu0 0.0
    %469 = vmatpush2.msra.mxu0 0.0
    %470 = vmatprep.subr.mxu0 0.0
    %471 = vmatpush2.msra.mxu0 0.0
    %472 = vmatprep.subr.mxu0 0.0
    %473 = vmatpush2.msra.mxu0 0.0
    %474 = vmatprep.subr.mxu0 0.0
    %475 = vmatpush2.msra.mxu0 0.0
    %476 = vmatprep.subr.mxu0 0.0
    %477 = vmatpush2.msra.mxu0 0.0
    %478 = vmatprep.subr.mxu0 0.0
    %479 = vmatpush2.msra.mxu0 0.0
    %480 = vmatprep.subr.mxu0 0.0
    %481 = vmatpush2.msra.mxu0 0.0
    %482 = vmatprep.mubr.f32.mxu0 0.0
    %483 = vmatmul.mubr.f32.gmra.mxu0 %v416
    %v484 = vpop.f32.mrf.mxu0
    %v485 = vadd.f32 0.0, %v484
    %v486 = vpop.f32.mrf.mxu0
    %487 = vdwg.mxu0
    %v488 = vadd.f32 %v415, %v485
    %v489 = vxor.u32 %v488, 2147483648
    %v490 = vmul.f32 %v489, 1.442695
    %v491 = vpow.pop %v490
    %v492 = vadd.f32 %v491, 1.0
    %v493 = vrcp.pop %v492
    %v494 = vmul.f32 1.0, %v493
    %v495 = vtanh.pop %v488
    %v496 = vmul.f32 %v494, %v401
    %498 = vrot.lane.b32.xlu0 %v495, 64
    %v499 = vpop.permute.xlu0 %498
    %v501 = vmul.f32 %v494, %v499
    %503 = vrot.lane.b32.xlu0 %v501, 32
    %v504 = vpop.permute.xlu0 %503
    %v506 = vadd.f32 %v496, %v504
    %v507 = vtanh.pop %v506
    %509 = vrot.lane.b32.xlu0 %v507, 64
    %v510 = vpop.permute.xlu0 %509
    %v512 = vmul.f32 %v494, %v510
    %514 = vrot.lane.b32.xlu0 %v512, 32
    %v515 = vpop.permute.xlu0 %514
    %s517 = scalar_lea.vmem [#allocation2], 16
    %518 = vst.msk [vmem:[%s517] sm:$0xff] %vm205, %v515
    %s519 = scalar_lea.vmem [#allocation3], 24
    %v520 = vld [vmem:[%s519] sm:$0xff]
    %v521 = vsel %vm205, %v515, 0
    %523 = vmatprep.subr.mxu0 0.0
    %524 = vmatpush1.msra.mxu0 0.0
    %525 = vmatprep.subr.mxu0 0.0
    %526 = vmatpush1.msra.mxu0 0.0
    %527 = vmatprep.subr.mxu0 0.0
    %528 = vmatpush1.msra.mxu0 0.0
    %529 = vmatprep.subr.mxu0 0.0
    %530 = vmatpush1.msra.mxu0 0.0
    %531 = vmatprep.subr.mxu0 0.0
    %532 = vmatpush1.msra.mxu0 0.0
    %533 = vmatprep.subr.mxu0 0.0
    %534 = vmatpush1.msra.mxu0 0.0
    %535 = vmatprep.subr.mxu0 0.0
    %536 = vmatpush1.msra.mxu0 0.0
    %537 = vmatprep.subr.mxu0 0.0
    %538 = vmatpush1.msra.mxu0 0.0
    %539 = vmatprep.subr.mxu0 0.0
    %540 = vmatpush1.msra.mxu0 0.0
    %541 = vmatprep.subr.mxu0 0.0
    %542 = vmatpush1.msra.mxu0 0.0
    %543 = vmatprep.subr.mxu0 0.0
    %544 = vmatpush1.msra.mxu0 0.0
    %545 = vmatprep.subr.mxu0 0.0
    %546 = vmatpush1.msra.mxu0 0.0
    %547 = vmatprep.subr.mxu0 0.0
    %548 = vmatpush1.msra.mxu0 %v203
    %549 = vmatprep.subr.mxu0 0.0
    %550 = vmatpush1.msra.mxu0 %v202
    %551 = vmatprep.subr.mxu0 0.0
    %552 = vmatpush1.msra.mxu0 %v201
    %553 = vmatprep.subr.mxu0 0.0
    %554 = vmatpush1.msra.mxu0 %v200
    %555 = vmatprep.subr.mxu0 0.0
    %556 = vmatpush2.msra.mxu0 0.0
    %557 = vmatprep.subr.mxu0 0.0
    %558 = vmatpush2.msra.mxu0 0.0
    %559 = vmatprep.subr.mxu0 0.0
    %560 = vmatpush2.msra.mxu0 0.0
    %561 = vmatprep.subr.mxu0 0.0
    %562 = vmatpush2.msra.mxu0 0.0
    %563 = vmatprep.subr.mxu0 0.0
    %564 = vmatpush2.msra.mxu0 0.0
    %565 = vmatprep.subr.mxu0 0.0
    %566 = vmatpush2.msra.mxu0 0.0
    %567 = vmatprep.subr.mxu0 0.0
    %568 = vmatpush2.msra.mxu0 0.0
    %569 = vmatprep.subr.mxu0 0.0
    %570 = vmatpush2.msra.mxu0 0.0
    %571 = vmatprep.subr.mxu0 0.0
    %572 = vmatpush2.msra.mxu0 0.0
    %573 = vmatprep.subr.mxu0 0.0
    %574 = vmatpush2.msra.mxu0 0.0
    %575 = vmatprep.subr.mxu0 0.0
    %576 = vmatpush2.msra.mxu0 0.0
    %577 = vmatprep.subr.mxu0 0.0
    %578 = vmatpush2.msra.mxu0 0.0
    %579 = vmatprep.subr.mxu0 0.0
    %580 = vmatpush2.msra.mxu0 0.0
    %581 = vmatprep.subr.mxu0 0.0
    %582 = vmatpush2.msra.mxu0 0.0
    %583 = vmatprep.subr.mxu0 0.0
    %584 = vmatpush2.msra.mxu0 0.0
    %585 = vmatprep.subr.mxu0 0.0
    %586 = vmatpush2.msra.mxu0 0.0
    %587 = vmatprep.mubr.f32.mxu0 0.0
    %588 = vmatmul.mubr.f32.gmra.mxu0 %v521
    %v589 = vpop.f32.mrf.mxu0
    %v590 = vadd.f32 0.0, %v589
    %v591 = vpop.f32.mrf.mxu0
    %592 = vdwg.mxu0
    %v593 = vadd.f32 %v520, %v590
    %v594 = vxor.u32 %v593, 2147483648
    %v595 = vmul.f32 %v594, 1.442695
    %v596 = vpow.pop %v595
    %v597 = vadd.f32 %v596, 1.0
    %v598 = vrcp.pop %v597
    %v599 = vmul.f32 1.0, %v598
    %v600 = vtanh.pop %v593
    %v601 = vmul.f32 %v599, %v506
    %603 = vrot.lane.b32.xlu0 %v600, 64
    %v604 = vpop.permute.xlu0 %603
    %v606 = vmul.f32 %v599, %v604
    %608 = vrot.lane.b32.xlu0 %v606, 32
    %v609 = vpop.permute.xlu0 %608
    %v611 = vadd.f32 %v601, %v609
    %v612 = vtanh.pop %v611
    %614 = vrot.lane.b32.xlu0 %v612, 64
    %v615 = vpop.permute.xlu0 %614
    %v617 = vmul.f32 %v599, %v615
    %619 = vrot.lane.b32.xlu0 %v617, 32
    %v620 = vpop.permute.xlu0 %619
    %s622 = scalar_lea.vmem [#allocation2], 24
    %623 = vst.msk [vmem:[%s622] sm:$0xff] %vm205, %v620
    %s624 = scalar_lea.vmem [#allocation3], 32
    %v625 = vld [vmem:[%s624] sm:$0xff]
    %v626 = vsel %vm205, %v620, 0
    %628 = vmatprep.subr.mxu0 0.0
    %629 = vmatpush1.msra.mxu0 0.0
    %630 = vmatprep.subr.mxu0 0.0
    %631 = vmatpush1.msra.mxu0 0.0
    %632 = vmatprep.subr.mxu0 0.0
    %633 = vmatpush1.msra.mxu0 0.0
    %634 = vmatprep.subr.mxu0 0.0
    %635 = vmatpush1.msra.mxu0 0.0
    %636 = vmatprep.subr.mxu0 0.0
    %637 = vmatpush1.msra.mxu0 0.0
    %638 = vmatprep.subr.mxu0 0.0
    %639 = vmatpush1.msra.mxu0 0.0
    %640 = vmatprep.subr.mxu0 0.0
    %641 = vmatpush1.msra.mxu0 0.0
    %642 = vmatprep.subr.mxu0 0.0
    %643 = vmatpush1.msra.mxu0 0.0
    %644 = vmatprep.subr.mxu0 0.0
    %645 = vmatpush1.msra.mxu0 0.0
    %646 = vmatprep.subr.mxu0 0.0
    %647 = vmatpush1.msra.mxu0 0.0
    %648 = vmatprep.subr.mxu0 0.0
    %649 = vmatpush1.msra.mxu0 0.0
    %650 = vmatprep.subr.mxu0 0.0
    %651 = vmatpush1.msra.mxu0 0.0
    %652 = vmatprep.subr.mxu0 0.0
    %653 = vmatpush1.msra.mxu0 %v203
    %654 = vmatprep.subr.mxu0 0.0
    %655 = vmatpush1.msra.mxu0 %v202
    %656 = vmatprep.subr.mxu0 0.0
    %657 = vmatpush1.msra.mxu0 %v201
    %658 = vmatprep.subr.mxu0 0.0
    %659 = vmatpush1.msra.mxu0 %v200
    %660 = vmatprep.subr.mxu0 0.0
    %661 = vmatpush2.msra.mxu0 0.0
    %662 = vmatprep.subr.mxu0 0.0
    %663 = vmatpush2.msra.mxu0 0.0
    %664 = vmatprep.subr.mxu0 0.0
    %665 = vmatpush2.msra.mxu0 0.0
    %666 = vmatprep.subr.mxu0 0.0
    %667 = vmatpush2.msra.mxu0 0.0
    %668 = vmatprep.subr.mxu0 0.0
    %669 = vmatpush2.msra.mxu0 0.0
    %670 = vmatprep.subr.mxu0 0.0
    %671 = vmatpush2.msra.mxu0 0.0
    %672 = vmatprep.subr.mxu0 0.0
    %673 = vmatpush2.msra.mxu0 0.0
    %674 = vmatprep.subr.mxu0 0.0
    %675 = vmatpush2.msra.mxu0 0.0
    %676 = vmatprep.subr.mxu0 0.0
    %677 = vmatpush2.msra.mxu0 0.0
    %678 = vmatprep.subr.mxu0 0.0
    %679 = vmatpush2.msra.mxu0 0.0
    %680 = vmatprep.subr.mxu0 0.0
    %681 = vmatpush2.msra.mxu0 0.0
    %682 = vmatprep.subr.mxu0 0.0
    %683 = vmatpush2.msra.mxu0 0.0
    %684 = vmatprep.subr.mxu0 0.0
    %685 = vmatpush2.msra.mxu0 0.0
    %686 = vmatprep.subr.mxu0 0.0
    %687 = vmatpush2.msra.mxu0 0.0
    %688 = vmatprep.subr.mxu0 0.0
    %689 = vmatpush2.msra.mxu0 0.0
    %690 = vmatprep.subr.mxu0 0.0
    %691 = vmatpush2.msra.mxu0 0.0
    %692 = vmatprep.mubr.f32.mxu0 0.0
    %693 = vmatmul.mubr.f32.gmra.mxu0 %v626
    %v694 = vpop.f32.mrf.mxu0
    %v695 = vadd.f32 0.0, %v694
    %v696 = vpop.f32.mrf.mxu0
    %697 = vdwg.mxu0
    %v698 = vadd.f32 %v625, %v695
    %v699 = vxor.u32 %v698, 2147483648
    %v700 = vmul.f32 %v699, 1.442695
    %v701 = vpow.pop %v700
    %v702 = vadd.f32 %v701, 1.0
    %v703 = vrcp.pop %v702
    %v704 = vmul.f32 1.0, %v703
    %v705 = vtanh.pop %v698
    %v706 = vmul.f32 %v704, %v611
    %708 = vrot.lane.b32.xlu0 %v705, 64
    %v709 = vpop.permute.xlu0 %708
    %v711 = vmul.f32 %v704, %v709
    %713 = vrot.lane.b32.xlu0 %v711, 32
    %v714 = vpop.permute.xlu0 %713
    %v716 = vadd.f32 %v706, %v714
    %v717 = vtanh.pop %v716
    %719 = vrot.lane.b32.xlu0 %v717, 64
    %v720 = vpop.permute.xlu0 %719
    %v722 = vmul.f32 %v704, %v720
    %724 = vrot.lane.b32.xlu0 %v722, 32
    %v725 = vpop.permute.xlu0 %724
    %s727 = scalar_lea.vmem [#allocation2], 32
    %728 = vst.msk [vmem:[%s727] sm:$0xff] %vm205, %v725
    %s729 = scalar_lea.vmem [#allocation3], 40
    %v730 = vld [vmem:[%s729] sm:$0xff]
    %v731 = vsel %vm205, %v725, 0
    %733 = vmatprep.subr.mxu0 0.0
    %734 = vmatpush1.msra.mxu0 0.0
    %735 = vmatprep.subr.mxu0 0.0
    %736 = vmatpush1.msra.mxu0 0.0
    %737 = vmatprep.subr.mxu0 0.0
    %738 = vmatpush1.msra.mxu0 0.0
    %739 = vmatprep.subr.mxu0 0.0
    %740 = vmatpush1.msra.mxu0 0.0
    %741 = vmatprep.subr.mxu0 0.0
    %742 = vmatpush1.msra.mxu0 0.0
    %743 = vmatprep.subr.mxu0 0.0
    %744 = vmatpush1.msra.mxu0 0.0
    %745 = vmatprep.subr.mxu0 0.0
    %746 = vmatpush1.msra.mxu0 0.0
    %747 = vmatprep.subr.mxu0 0.0
    %748 = vmatpush1.msra.mxu0 0.0
    %749 = vmatprep.subr.mxu0 0.0
    %750 = vmatpush1.msra.mxu0 0.0
    %751 = vmatprep.subr.mxu0 0.0
    %752 = vmatpush1.msra.mxu0 0.0
    %753 = vmatprep.subr.mxu0 0.0
    %754 = vmatpush1.msra.mxu0 0.0
    %755 = vmatprep.subr.mxu0 0.0
    %756 = vmatpush1.msra.mxu0 0.0
    %757 = vmatprep.subr.mxu0 0.0
    %758 = vmatpush1.msra.mxu0 %v203
    %759 = vmatprep.subr.mxu0 0.0
    %760 = vmatpush1.msra.mxu0 %v202
    %761 = vmatprep.subr.mxu0 0.0
    %762 = vmatpush1.msra.mxu0 %v201
    %763 = vmatprep.subr.mxu0 0.0
    %764 = vmatpush1.msra.mxu0 %v200
    %765 = vmatprep.subr.mxu0 0.0
    %766 = vmatpush2.msra.mxu0 0.0
    %767 = vmatprep.subr.mxu0 0.0
    %768 = vmatpush2.msra.mxu0 0.0
    %769 = vmatprep.subr.mxu0 0.0
    %770 = vmatpush2.msra.mxu0 0.0
    %771 = vmatprep.subr.mxu0 0.0
    %772 = vmatpush2.msra.mxu0 0.0
    %773 = vmatprep.subr.mxu0 0.0
    %774 = vmatpush2.msra.mxu0 0.0
    %775 = vmatprep.subr.mxu0 0.0
    %776 = vmatpush2.msra.mxu0 0.0
    %777 = vmatprep.subr.mxu0 0.0
    %778 = vmatpush2.msra.mxu0 0.0
    %779 = vmatprep.subr.mxu0 0.0
    %780 = vmatpush2.msra.mxu0 0.0
    %781 = vmatprep.subr.mxu0 0.0
    %782 = vmatpush2.msra.mxu0 0.0
    %783 = vmatprep.subr.mxu0 0.0
    %784 = vmatpush2.msra.mxu0 0.0
    %785 = vmatprep.subr.mxu0 0.0
    %786 = vmatpush2.msra.mxu0 0.0
    %787 = vmatprep.subr.mxu0 0.0
    %788 = vmatpush2.msra.mxu0 0.0
    %789 = vmatprep.subr.mxu0 0.0
    %790 = vmatpush2.msra.mxu0 0.0
    %791 = vmatprep.subr.mxu0 0.0
    %792 = vmatpush2.msra.mxu0 0.0
    %793 = vmatprep.subr.mxu0 0.0
    %794 = vmatpush2.msra.mxu0 0.0
    %795 = vmatprep.subr.mxu0 0.0
    %796 = vmatpush2.msra.mxu0 0.0
    %797 = vmatprep.mubr.f32.mxu0 0.0
    %798 = vmatmul.mubr.f32.gmra.mxu0 %v731
    %v799 = vpop.f32.mrf.mxu0
    %v800 = vadd.f32 0.0, %v799
    %v801 = vpop.f32.mrf.mxu0
    %802 = vdwg.mxu0
    %v803 = vadd.f32 %v730, %v800
    %v804 = vxor.u32 %v803, 2147483648
    %v805 = vmul.f32 %v804, 1.442695
    %v806 = vpow.pop %v805
    %v807 = vadd.f32 %v806, 1.0
    %v808 = vrcp.pop %v807
    %v809 = vmul.f32 1.0, %v808
    %v810 = vtanh.pop %v803
    %v811 = vmul.f32 %v809, %v716
    %813 = vrot.lane.b32.xlu0 %v810, 64
    %v814 = vpop.permute.xlu0 %813
    %v816 = vmul.f32 %v809, %v814
    %818 = vrot.lane.b32.xlu0 %v816, 32
    %v819 = vpop.permute.xlu0 %818
    %v821 = vadd.f32 %v811, %v819
    %v822 = vtanh.pop %v821
    %824 = vrot.lane.b32.xlu0 %v822, 64
    %v825 = vpop.permute.xlu0 %824
    %v827 = vmul.f32 %v809, %v825
    %829 = vrot.lane.b32.xlu0 %v827, 32
    %v830 = vpop.permute.xlu0 %829
    %s832 = scalar_lea.vmem [#allocation2], 40
    %833 = vst.msk [vmem:[%s832] sm:$0xff] %vm205, %v830
    %s834 = scalar_lea.vmem [#allocation3], 48
    %v835 = vld [vmem:[%s834] sm:$0xff]
    %v836 = vsel %vm205, %v830, 0
    %838 = vmatprep.subr.mxu0 0.0
    %839 = vmatpush1.msra.mxu0 0.0
    %840 = vmatprep.subr.mxu0 0.0
    %841 = vmatpush1.msra.mxu0 0.0
    %842 = vmatprep.subr.mxu0 0.0
    %843 = vmatpush1.msra.mxu0 0.0
    %844 = vmatprep.subr.mxu0 0.0
    %845 = vmatpush1.msra.mxu0 0.0
    %846 = vmatprep.subr.mxu0 0.0
    %847 = vmatpush1.msra.mxu0 0.0
    %848 = vmatprep.subr.mxu0 0.0
    %849 = vmatpush1.msra.mxu0 0.0
    %850 = vmatprep.subr.mxu0 0.0
    %851 = vmatpush1.msra.mxu0 0.0
    %852 = vmatprep.subr.mxu0 0.0
    %853 = vmatpush1.msra.mxu0 0.0
    %854 = vmatprep.subr.mxu0 0.0
    %855 = vmatpush1.msra.mxu0 0.0
    %856 = vmatprep.subr.mxu0 0.0
    %857 = vmatpush1.msra.mxu0 0.0
    %858 = vmatprep.subr.mxu0 0.0
    %859 = vmatpush1.msra.mxu0 0.0
    %860 = vmatprep.subr.mxu0 0.0
    %861 = vmatpush1.msra.mxu0 0.0
    %862 = vmatprep.subr.mxu0 0.0
    %863 = vmatpush1.msra.mxu0 %v203
    %864 = vmatprep.subr.mxu0 0.0
    %865 = vmatpush1.msra.mxu0 %v202
    %866 = vmatprep.subr.mxu0 0.0
    %867 = vmatpush1.msra.mxu0 %v201
    %868 = vmatprep.subr.mxu0 0.0
    %869 = vmatpush1.msra.mxu0 %v200
    %870 = vmatprep.subr.mxu0 0.0
    %871 = vmatpush2.msra.mxu0 0.0
    %872 = vmatprep.subr.mxu0 0.0
    %873 = vmatpush2.msra.mxu0 0.0
    %874 = vmatprep.subr.mxu0 0.0
    %875 = vmatpush2.msra.mxu0 0.0
    %876 = vmatprep.subr.mxu0 0.0
    %877 = vmatpush2.msra.mxu0 0.0
    %878 = vmatprep.subr.mxu0 0.0
    %879 = vmatpush2.msra.mxu0 0.0
    %880 = vmatprep.subr.mxu0 0.0
    %881 = vmatpush2.msra.mxu0 0.0
    %882 = vmatprep.subr.mxu0 0.0
    %883 = vmatpush2.msra.mxu0 0.0
    %884 = vmatprep.subr.mxu0 0.0
    %885 = vmatpush2.msra.mxu0 0.0
    %886 = vmatprep.subr.mxu0 0.0
    %887 = vmatpush2.msra.mxu0 0.0
    %888 = vmatprep.subr.mxu0 0.0
    %889 = vmatpush2.msra.mxu0 0.0
    %890 = vmatprep.subr.mxu0 0.0
    %891 = vmatpush2.msra.mxu0 0.0
    %892 = vmatprep.subr.mxu0 0.0
    %893 = vmatpush2.msra.mxu0 0.0
    %894 = vmatprep.subr.mxu0 0.0
    %895 = vmatpush2.msra.mxu0 0.0
    %896 = vmatprep.subr.mxu0 0.0
    %897 = vmatpush2.msra.mxu0 0.0
    %898 = vmatprep.subr.mxu0 0.0
    %899 = vmatpush2.msra.mxu0 0.0
    %900 = vmatprep.subr.mxu0 0.0
    %901 = vmatpush2.msra.mxu0 0.0
    %902 = vmatprep.mubr.f32.mxu0 0.0
    %903 = vmatmul.mubr.f32.gmra.mxu0 %v836
    %v904 = vpop.f32.mrf.mxu0
    %v905 = vadd.f32 0.0, %v904
    %v906 = vpop.f32.mrf.mxu0
    %907 = vdwg.mxu0
    %v908 = vadd.f32 %v835, %v905
    %v909 = vxor.u32 %v908, 2147483648
    %v910 = vmul.f32 %v909, 1.442695
    %v911 = vpow.pop %v910
    %v912 = vadd.f32 %v911, 1.0
    %v913 = vrcp.pop %v912
    %v914 = vmul.f32 1.0, %v913
    %v915 = vtanh.pop %v908
    %v916 = vmul.f32 %v914, %v821
    %918 = vrot.lane.b32.xlu0 %v915, 64
    %v919 = vpop.permute.xlu0 %918
    %v921 = vmul.f32 %v914, %v919
    %923 = vrot.lane.b32.xlu0 %v921, 32
    %v924 = vpop.permute.xlu0 %923
    %v926 = vadd.f32 %v916, %v924
    %v927 = vtanh.pop %v926
    %929 = vrot.lane.b32.xlu0 %v927, 64
    %v930 = vpop.permute.xlu0 %929
    %v932 = vmul.f32 %v914, %v930
    %934 = vrot.lane.b32.xlu0 %v932, 32
    %v935 = vpop.permute.xlu0 %934
    %s937 = scalar_lea.vmem [#allocation2], 48
    %938 = vst.msk [vmem:[%s937] sm:$0xff] %vm205, %v935
    %s939 = scalar_lea.vmem [#allocation3], 56
    %v940 = vld [vmem:[%s939] sm:$0xff]
    %v941 = vsel %vm205, %v935, 0
    %943 = vmatprep.subr.mxu0 0.0
    %944 = vmatpush1.msra.mxu0 0.0
    %945 = vmatprep.subr.mxu0 0.0
    %946 = vmatpush1.msra.mxu0 0.0
    %947 = vmatprep.subr.mxu0 0.0
    %948 = vmatpush1.msra.mxu0 0.0
    %949 = vmatprep.subr.mxu0 0.0
    %950 = vmatpush1.msra.mxu0 0.0
    %951 = vmatprep.subr.mxu0 0.0
    %952 = vmatpush1.msra.mxu0 0.0
    %953 = vmatprep.subr.mxu0 0.0
    %954 = vmatpush1.msra.mxu0 0.0
    %955 = vmatprep.subr.mxu0 0.0
    %956 = vmatpush1.msra.mxu0 0.0
    %957 = vmatprep.subr.mxu0 0.0
    %958 = vmatpush1.msra.mxu0 0.0
    %959 = vmatprep.subr.mxu0 0.0
    %960 = vmatpush1.msra.mxu0 0.0
    %961 = vmatprep.subr.mxu0 0.0
    %962 = vmatpush1.msra.mxu0 0.0
    %963 = vmatprep.subr.mxu0 0.0
    %964 = vmatpush1.msra.mxu0 0.0
    %965 = vmatprep.subr.mxu0 0.0
    %966 = vmatpush1.msra.mxu0 0.0
    %967 = vmatprep.subr.mxu0 0.0
    %968 = vmatpush1.msra.mxu0 %v203
    %969 = vmatprep.subr.mxu0 0.0
    %970 = vmatpush1.msra.mxu0 %v202
    %971 = vmatprep.subr.mxu0 0.0
    %972 = vmatpush1.msra.mxu0 %v201
    %973 = vmatprep.subr.mxu0 0.0
    %974 = vmatpush1.msra.mxu0 %v200
    %975 = vmatprep.subr.mxu0 0.0
    %976 = vmatpush2.msra.mxu0 0.0
    %977 = vmatprep.subr.mxu0 0.0
    %978 = vmatpush2.msra.mxu0 0.0
    %979 = vmatprep.subr.mxu0 0.0
    %980 = vmatpush2.msra.mxu0 0.0
    %981 = vmatprep.subr.mxu0 0.0
    %982 = vmatpush2.msra.mxu0 0.0
    %983 = vmatprep.subr.mxu0 0.0
    %984 = vmatpush2.msra.mxu0 0.0
    %985 = vmatprep.subr.mxu0 0.0
    %986 = vmatpush2.msra.mxu0 0.0
    %987 = vmatprep.subr.mxu0 0.0
    %988 = vmatpush2.msra.mxu0 0.0
    %989 = vmatprep.subr.mxu0 0.0
    %990 = vmatpush2.msra.mxu0 0.0
    %991 = vmatprep.subr.mxu0 0.0
    %992 = vmatpush2.msra.mxu0 0.0
    %993 = vmatprep.subr.mxu0 0.0
    %994 = vmatpush2.msra.mxu0 0.0
    %995 = vmatprep.subr.mxu0 0.0
    %996 = vmatpush2.msra.mxu0 0.0
    %997 = vmatprep.subr.mxu0 0.0
    %998 = vmatpush2.msra.mxu0 0.0
    %999 = vmatprep.subr.mxu0 0.0
    %1000 = vmatpush2.msra.mxu0 0.0
    %1001 = vmatprep.subr.mxu0 0.0
    %1002 = vmatpush2.msra.mxu0 0.0
    %1003 = vmatprep.subr.mxu0 0.0
    %1004 = vmatpush2.msra.mxu0 0.0
    %1005 = vmatprep.subr.mxu0 0.0
    %1006 = vmatpush2.msra.mxu0 0.0
    %1007 = vmatprep.mubr.f32.mxu0 0.0
    %1008 = vmatmul.mubr.f32.gmra.mxu0 %v941
    %v1009 = vpop.f32.mrf.mxu0
    %v1010 = vadd.f32 0.0, %v1009
    %v1011 = vpop.f32.mrf.mxu0
    %1012 = vdwg.mxu0
    %v1013 = vadd.f32 %v940, %v1010
    %v1014 = vxor.u32 %v1013, 2147483648
    %v1015 = vmul.f32 %v1014, 1.442695
    %v1016 = vpow.pop %v1015
    %v1017 = vadd.f32 %v1016, 1.0
    %v1018 = vrcp.pop %v1017
    %v1019 = vmul.f32 1.0, %v1018
    %v1020 = vtanh.pop %v1013
    %v1021 = vmul.f32 %v1019, %v926
    %1023 = vrot.lane.b32.xlu0 %v1020, 64
    %v1024 = vpop.permute.xlu0 %1023
    %v1026 = vmul.f32 %v1019, %v1024
    %1028 = vrot.lane.b32.xlu0 %v1026, 32
    %v1029 = vpop.permute.xlu0 %1028
    %v1031 = vadd.f32 %v1021, %v1029
    %v1032 = vtanh.pop %v1031
    %1034 = vrot.lane.b32.xlu0 %v1032, 64
    %v1035 = vpop.permute.xlu0 %1034
    %v1037 = vmul.f32 %v1019, %v1035
    %1039 = vrot.lane.b32.xlu0 %v1037, 32
    %v1040 = vpop.permute.xlu0 %1039
    %s1042 = scalar_lea.vmem [#allocation2], 56
    %1043 = vst.msk [vmem:[%s1042] sm:$0xff] %vm205, %v1040
    %v1044 = vld [vmem:[%s4] sm:$0xff]
    %v1045 = vld [vmem:[%s4 + $0x8] sm:$0xff]
    %v1046 = vld [vmem:[%s4 + $0x10] sm:$0xff]
    %v1047 = vld [vmem:[%s4 + $0x18] sm:$0xff]
    %v1048 = vld [vmem:[#allocation2] sm:$0xff]
    %v1049 = vld [vmem:[#allocation2 + $0x8] sm:$0xff]
    %v1050 = vld [vmem:[#allocation2 + $0x10] sm:$0xff]
    %v1051 = vld [vmem:[#allocation2 + $0x18] sm:$0xff]
    %v1052 = vld [vmem:[#allocation2 + $0x20] sm:$0xff]
    %v1053 = vld [vmem:[#allocation2 + $0x28] sm:$0xff]
    %v1054 = vld [vmem:[#allocation2 + $0x30] sm:$0xff]
    %v1055 = vld [vmem:[#allocation2 + $0x38] sm:$0xff]
    %v1056 = vld [vmem:[%s6] sm:$0x1]
    %v1058 = vlaneseq
    %v1059 = vshrl.u32 %v1058, 7
    %v1060 = vsub.s32 0, %v1059
    %v1061 = vrot.slane %v1056, %v1060
    %v1064 = vsel %vm205, %v1048, 0
    %v1067 = vsel %vm205, %v1049, 0
    %v1070 = vsel %vm205, %v1050, 0
    %v1073 = vsel %vm205, %v1051, 0
    %v1076 = vsel %vm205, %v1052, 0
    %v1079 = vsel %vm205, %v1053, 0
    %v1082 = vsel %vm205, %v1054, 0
    %v1085 = vsel %vm205, %v1055, 0
    %1087 = vmatprep.subr.mxu0 0.0
    %1088 = vmatpush1.msra.mxu0 0.0
    %1089 = vmatprep.subr.mxu0 0.0
    %1090 = vmatpush1.msra.mxu0 0.0
    %1091 = vmatprep.subr.mxu0 0.0
    %1092 = vmatpush1.msra.mxu0 0.0
    %1093 = vmatprep.subr.mxu0 0.0
    %1094 = vmatpush1.msra.mxu0 0.0
    %1095 = vmatprep.subr.mxu0 0.0
    %1096 = vmatpush1.msra.mxu0 0.0
    %1097 = vmatprep.subr.mxu0 0.0
    %1098 = vmatpush1.msra.mxu0 0.0
    %1099 = vmatprep.subr.mxu0 0.0
    %1100 = vmatpush1.msra.mxu0 0.0
    %1101 = vmatprep.subr.mxu0 0.0
    %1102 = vmatpush1.msra.mxu0 0.0
    %1103 = vmatprep.subr.mxu0 0.0
    %1104 = vmatpush1.msra.mxu0 0.0
    %1105 = vmatprep.subr.mxu0 0.0
    %1106 = vmatpush1.msra.mxu0 0.0
    %1107 = vmatprep.subr.mxu0 0.0
    %1108 = vmatpush1.msra.mxu0 0.0
    %1109 = vmatprep.subr.mxu0 0.0
    %1110 = vmatpush1.msra.mxu0 0.0
    %1111 = vmatprep.subr.mxu0 0.0
    %1112 = vmatpush1.msra.mxu0 %v1047
    %1113 = vmatprep.subr.mxu0 0.0
    %1114 = vmatpush1.msra.mxu0 %v1046
    %1115 = vmatprep.subr.mxu0 0.0
    %1116 = vmatpush1.msra.mxu0 %v1045
    %1117 = vmatprep.subr.mxu0 0.0
    %1118 = vmatpush1.msra.mxu0 %v1044
    %1119 = vmatprep.subr.mxu0 0.0
    %1120 = vmatpush2.msra.mxu0 0.0
    %1121 = vmatprep.subr.mxu0 0.0
    %1122 = vmatpush2.msra.mxu0 0.0
    %1123 = vmatprep.subr.mxu0 0.0
    %1124 = vmatpush2.msra.mxu0 0.0
    %1125 = vmatprep.subr.mxu0 0.0
    %1126 = vmatpush2.msra.mxu0 0.0
    %1127 = vmatprep.subr.mxu0 0.0
    %1128 = vmatpush2.msra.mxu0 0.0
    %1129 = vmatprep.subr.mxu0 0.0
    %1130 = vmatpush2.msra.mxu0 0.0
    %1131 = vmatprep.subr.mxu0 0.0
    %1132 = vmatpush2.msra.mxu0 0.0
    %1133 = vmatprep.subr.mxu0 0.0
    %1134 = vmatpush2.msra.mxu0 0.0
    %1135 = vmatprep.subr.mxu0 0.0
    %1136 = vmatpush2.msra.mxu0 0.0
    %1137 = vmatprep.subr.mxu0 0.0
    %1138 = vmatpush2.msra.mxu0 0.0
    %1139 = vmatprep.subr.mxu0 0.0
    %1140 = vmatpush2.msra.mxu0 0.0
    %1141 = vmatprep.subr.mxu0 0.0
    %1142 = vmatpush2.msra.mxu0 0.0
    %1143 = vmatprep.subr.mxu0 0.0
    %1144 = vmatpush2.msra.mxu0 0.0
    %1145 = vmatprep.subr.mxu0 0.0
    %1146 = vmatpush2.msra.mxu0 0.0
    %1147 = vmatprep.subr.mxu0 0.0
    %1148 = vmatpush2.msra.mxu0 0.0
    %1149 = vmatprep.subr.mxu0 0.0
    %1150 = vmatpush2.msra.mxu0 0.0
    %1151 = vmatprep.mubr.f32.mxu0 0.0
    %1152 = vmatmul.mubr.f32.gmra.mxu0 %v1064
    %v1153 = vpop.f32.mrf.mxu0
    %v1154 = vadd.f32 %v1061, %v1153
    %v1155 = vpop.f32.mrf.mxu0
    %1156 = vmatprep.mubr.f32.mxu0 0.0
    %1157 = vmatmul.mubr.f32.gmra.mxu0 %v1067
    %v1158 = vpop.f32.mrf.mxu0
    %v1159 = vadd.f32 %v1061, %v1158
    %v1160 = vpop.f32.mrf.mxu0
    %1161 = vmatprep.mubr.f32.mxu0 0.0
    %1162 = vmatmul.mubr.f32.gmra.mxu0 %v1070
    %v1163 = vpop.f32.mrf.mxu0
    %v1164 = vadd.f32 %v1061, %v1163
    %v1165 = vpop.f32.mrf.mxu0
    %1166 = vmatprep.mubr.f32.mxu0 0.0
    %1167 = vmatmul.mubr.f32.gmra.mxu0 %v1073
    %v1168 = vpop.f32.mrf.mxu0
    %v1169 = vadd.f32 %v1061, %v1168
    %v1170 = vpop.f32.mrf.mxu0
    %1171 = vmatprep.mubr.f32.mxu0 0.0
    %1172 = vmatmul.mubr.f32.gmra.mxu0 %v1076
    %v1173 = vpop.f32.mrf.mxu0
    %v1174 = vadd.f32 %v1061, %v1173
    %v1175 = vpop.f32.mrf.mxu0
    %1176 = vmatprep.mubr.f32.mxu0 0.0
    %1177 = vmatmul.mubr.f32.gmra.mxu0 %v1079
    %v1178 = vpop.f32.mrf.mxu0
    %v1179 = vadd.f32 %v1061, %v1178
    %v1180 = vpop.f32.mrf.mxu0
    %1181 = vmatprep.mubr.f32.mxu0 0.0
    %1182 = vmatmul.mubr.f32.gmra.mxu0 %v1082
    %v1183 = vpop.f32.mrf.mxu0
    %v1184 = vadd.f32 %v1061, %v1183
    %v1185 = vpop.f32.mrf.mxu0
    %1186 = vmatprep.mubr.f32.mxu0 0.0
    %1187 = vmatmul.mubr.f32.gmra.mxu0 %v1085
    %v1188 = vpop.f32.mrf.mxu0
    %v1189 = vadd.f32 %v1061, %v1188
    %v1190 = vpop.f32.mrf.mxu0
    %1191 = vdwg.mxu0
    %1192 = vst [vmem:[#allocation3] sm:$0xff] %v1154
    %1193 = vst [vmem:[#allocation3 + $0x8] sm:$0xff] %v1159
    %1194 = vst [vmem:[#allocation3 + $0x10] sm:$0xff] %v1164
    %1195 = vst [vmem:[#allocation3 + $0x18] sm:$0xff] %v1169
    %1196 = vst [vmem:[#allocation3 + $0x20] sm:$0xff] %v1174
    %1197 = vst [vmem:[#allocation3 + $0x28] sm:$0xff] %v1179
    %1198 = vst [vmem:[#allocation3 + $0x30] sm:$0xff] %v1184
    %1199 = vst [vmem:[#allocation3 + $0x38] sm:$0xff] %v1189
    %v1200 = vld [vmem:[%s5] sm:$0xff]
    %v1201 = vld [vmem:[%s5 + $0x8] sm:$0xff]
    %v1202 = vld [vmem:[%s5 + $0x10] sm:$0xff]
    %v1203 = vld [vmem:[%s5 + $0x18] sm:$0xff]
    %v1204 = vld [vmem:[#allocation3] sm:$0xff]
    %1205 = vmatprep.subr.mxu0 0.0
    %1206 = vmatpush1.msra.mxu0 0.0
    %1207 = vmatprep.subr.mxu0 0.0
    %1208 = vmatpush1.msra.mxu0 0.0
    %1209 = vmatprep.subr.mxu0 0.0
    %1210 = vmatpush1.msra.mxu0 0.0
    %1211 = vmatprep.subr.mxu0 0.0
    %1212 = vmatpush1.msra.mxu0 0.0
    %1213 = vmatprep.subr.mxu0 0.0
    %1214 = vmatpush1.msra.mxu0 0.0
    %1215 = vmatprep.subr.mxu0 0.0
    %1216 = vmatpush1.msra.mxu0 0.0
    %1217 = vmatprep.subr.mxu0 0.0
    %1218 = vmatpush1.msra.mxu0 0.0
    %1219 = vmatprep.subr.mxu0 0.0
    %1220 = vmatpush1.msra.mxu0 0.0
    %1221 = vmatprep.subr.mxu0 0.0
    %1222 = vmatpush1.msra.mxu0 0.0
    %1223 = vmatprep.subr.mxu0 0.0
    %1224 = vmatpush1.msra.mxu0 0.0
    %1225 = vmatprep.subr.mxu0 0.0
    %1226 = vmatpush1.msra.mxu0 0.0
    %1227 = vmatprep.subr.mxu0 0.0
    %1228 = vmatpush1.msra.mxu0 0.0
    %1229 = vmatprep.subr.mxu0 0.0
    %1230 = vmatpush1.msra.mxu0 %v1203
    %1231 = vmatprep.subr.mxu0 0.0
    %1232 = vmatpush1.msra.mxu0 %v1202
    %1233 = vmatprep.subr.mxu0 0.0
    %1234 = vmatpush1.msra.mxu0 %v1201
    %1235 = vmatprep.subr.mxu0 0.0
    %1236 = vmatpush1.msra.mxu0 %v1200
    %1237 = vmatprep.subr.mxu0 0.0
    %1238 = vmatpush2.msra.mxu0 0.0
    %1239 = vmatprep.subr.mxu0 0.0
    %1240 = vmatpush2.msra.mxu0 0.0
    %1241 = vmatprep.subr.mxu0 0.0
    %1242 = vmatpush2.msra.mxu0 0.0
    %1243 = vmatprep.subr.mxu0 0.0
    %1244 = vmatpush2.msra.mxu0 0.0
    %1245 = vmatprep.subr.mxu0 0.0
    %1246 = vmatpush2.msra.mxu0 0.0
    %1247 = vmatprep.subr.mxu0 0.0
    %1248 = vmatpush2.msra.mxu0 0.0
    %1249 = vmatprep.subr.mxu0 0.0
    %1250 = vmatpush2.msra.mxu0 0.0
    %1251 = vmatprep.subr.mxu0 0.0
    %1252 = vmatpush2.msra.mxu0 0.0
    %1253 = vmatprep.subr.mxu0 0.0
    %1254 = vmatpush2.msra.mxu0 0.0
    %1255 = vmatprep.subr.mxu0 0.0
    %1256 = vmatpush2.msra.mxu0 0.0
    %1257 = vmatprep.subr.mxu0 0.0
    %1258 = vmatpush2.msra.mxu0 0.0
    %1259 = vmatprep.subr.mxu0 0.0
    %1260 = vmatpush2.msra.mxu0 0.0
    %1261 = vmatprep.subr.mxu0 0.0
    %1262 = vmatpush2.msra.mxu0 0.0
    %1263 = vmatprep.subr.mxu0 0.0
    %1264 = vmatpush2.msra.mxu0 0.0
    %1265 = vmatprep.subr.mxu0 0.0
    %1266 = vmatpush2.msra.mxu0 0.0
    %1267 = vmatprep.subr.mxu0 0.0
    %1268 = vmatpush2.msra.mxu0 0.0
    %1269 = vmatprep.mubr.f32.mxu0 0.0
    %1270 = vmatmul.mubr.f32.gmra.mxu0 %v207
    %v1271 = vpop.f32.mrf.mxu0
    %v1272 = vadd.f32 0.0, %v1271
    %v1273 = vpop.f32.mrf.mxu0
    %1274 = vdwg.mxu0
    %v1275 = vadd.f32 %v1204, %v1272
    %v1276 = vxor.u32 %v1275, 2147483648
    %v1277 = vmul.f32 %v1276, 1.442695
    %v1278 = vpow.pop %v1277
    %v1279 = vadd.f32 %v1278, 1.0
    %v1280 = vrcp.pop %v1279
    %v1281 = vmul.f32 1.0, %v1280
    %v1282 = vtanh.pop %v1275
    %v1283 = vmul.f32 %v1281, 0.0
    %1285 = vrot.lane.b32.xlu0 %v1282, 64
    %v1286 = vpop.permute.xlu0 %1285
    %v1288 = vmul.f32 %v1281, %v1286
    %1290 = vrot.lane.b32.xlu0 %v1288, 32
    %v1291 = vpop.permute.xlu0 %1290
    %v1293 = vadd.f32 %v1283, %v1291
    %v1294 = vtanh.pop %v1293
    %1296 = vrot.lane.b32.xlu0 %v1294, 64
    %v1297 = vpop.permute.xlu0 %1296
    %v1299 = vmul.f32 %v1281, %v1297
    %v1300 = vld [vmem:[%s309] sm:$0xff]
    %1302 = vrot.lane.b32.xlu0 %v1299, 32
    %v1303 = vpop.permute.xlu0 %1302
    %v1304 = vsel %vm205, %v1303, 0
    %1306 = vmatprep.subr.mxu0 0.0
    %1307 = vmatpush1.msra.mxu0 0.0
    %1308 = vmatprep.subr.mxu0 0.0
    %1309 = vmatpush1.msra.mxu0 0.0
    %1310 = vmatprep.subr.mxu0 0.0
    %1311 = vmatpush1.msra.mxu0 0.0
    %1312 = vmatprep.subr.mxu0 0.0
    %1313 = vmatpush1.msra.mxu0 0.0
    %1314 = vmatprep.subr.mxu0 0.0
    %1315 = vmatpush1.msra.mxu0 0.0
    %1316 = vmatprep.subr.mxu0 0.0
    %1317 = vmatpush1.msra.mxu0 0.0
    %1318 = vmatprep.subr.mxu0 0.0
    %1319 = vmatpush1.msra.mxu0 0.0
    %1320 = vmatprep.subr.mxu0 0.0
    %1321 = vmatpush1.msra.mxu0 0.0
    %1322 = vmatprep.subr.mxu0 0.0
    %1323 = vmatpush1.msra.mxu0 0.0
    %1324 = vmatprep.subr.mxu0 0.0
    %1325 = vmatpush1.msra.mxu0 0.0
    %1326 = vmatprep.subr.mxu0 0.0
    %1327 = vmatpush1.msra.mxu0 0.0
    %1328 = vmatprep.subr.mxu0 0.0
    %1329 = vmatpush1.msra.mxu0 0.0
    %1330 = vmatprep.subr.mxu0 0.0
    %1331 = vmatpush1.msra.mxu0 %v1203
    %1332 = vmatprep.subr.mxu0 0.0
    %1333 = vmatpush1.msra.mxu0 %v1202
    %1334 = vmatprep.subr.mxu0 0.0
    %1335 = vmatpush1.msra.mxu0 %v1201
    %1336 = vmatprep.subr.mxu0 0.0
    %1337 = vmatpush1.msra.mxu0 %v1200
    %1338 = vmatprep.subr.mxu0 0.0
    %1339 = vmatpush2.msra.mxu0 0.0
    %1340 = vmatprep.subr.mxu0 0.0
    %1341 = vmatpush2.msra.mxu0 0.0
    %1342 = vmatprep.subr.mxu0 0.0
    %1343 = vmatpush2.msra.mxu0 0.0
    %1344 = vmatprep.subr.mxu0 0.0
    %1345 = vmatpush2.msra.mxu0 0.0
    %1346 = vmatprep.subr.mxu0 0.0
    %1347 = vmatpush2.msra.mxu0 0.0
    %1348 = vmatprep.subr.mxu0 0.0
    %1349 = vmatpush2.msra.mxu0 0.0
    %1350 = vmatprep.subr.mxu0 0.0
    %1351 = vmatpush2.msra.mxu0 0.0
    %1352 = vmatprep.subr.mxu0 0.0
    %1353 = vmatpush2.msra.mxu0 0.0
    %1354 = vmatprep.subr.mxu0 0.0
    %1355 = vmatpush2.msra.mxu0 0.0
    %1356 = vmatprep.subr.mxu0 0.0
    %1357 = vmatpush2.msra.mxu0 0.0
    %1358 = vmatprep.subr.mxu0 0.0
    %1359 = vmatpush2.msra.mxu0 0.0
    %1360 = vmatprep.subr.mxu0 0.0
    %1361 = vmatpush2.msra.mxu0 0.0
    %1362 = vmatprep.subr.mxu0 0.0
    %1363 = vmatpush2.msra.mxu0 0.0
    %1364 = vmatprep.subr.mxu0 0.0
    %1365 = vmatpush2.msra.mxu0 0.0
    %1366 = vmatprep.subr.mxu0 0.0
    %1367 = vmatpush2.msra.mxu0 0.0
    %1368 = vmatprep.subr.mxu0 0.0
    %1369 = vmatpush2.msra.mxu0 0.0
    %1370 = vmatprep.mubr.f32.mxu0 0.0
    %1371 = vmatmul.mubr.f32.gmra.mxu0 %v1304
    %v1372 = vpop.f32.mrf.mxu0
    %v1373 = vadd.f32 0.0, %v1372
    %v1374 = vpop.f32.mrf.mxu0
    %1375 = vdwg.mxu0
    %v1376 = vadd.f32 %v1300, %v1373
    %v1377 = vxor.u32 %v1376, 2147483648
    %v1378 = vmul.f32 %v1377, 1.442695
    %v1379 = vpow.pop %v1378
    %v1380 = vadd.f32 %v1379, 1.0
    %v1381 = vrcp.pop %v1380
    %v1382 = vmul.f32 1.0, %v1381
    %v1383 = vtanh.pop %v1376
    %v1384 = vmul.f32 %v1382, %v1293
    %1386 = vrot.lane.b32.xlu0 %v1383, 64
    %v1387 = vpop.permute.xlu0 %1386
    %v1389 = vmul.f32 %v1382, %v1387
    %1391 = vrot.lane.b32.xlu0 %v1389, 32
    %v1392 = vpop.permute.xlu0 %1391
    %v1394 = vadd.f32 %v1384, %v1392
    %v1395 = vtanh.pop %v1394
    %1397 = vrot.lane.b32.xlu0 %v1395, 64
    %v1398 = vpop.permute.xlu0 %1397
    %v1400 = vmul.f32 %v1382, %v1398
    %v1401 = vld [vmem:[%s414] sm:$0xff]
    %1403 = vrot.lane.b32.xlu0 %v1400, 32
    %v1404 = vpop.permute.xlu0 %1403
    %v1405 = vsel %vm205, %v1404, 0
    %1407 = vmatprep.subr.mxu0 0.0
    %1408 = vmatpush1.msra.mxu0 0.0
    %1409 = vmatprep.subr.mxu0 0.0
    %1410 = vmatpush1.msra.mxu0 0.0
    %1411 = vmatprep.subr.mxu0 0.0
    %1412 = vmatpush1.msra.mxu0 0.0
    %1413 = vmatprep.subr.mxu0 0.0
    %1414 = vmatpush1.msra.mxu0 0.0
    %1415 = vmatprep.subr.mxu0 0.0
    %1416 = vmatpush1.msra.mxu0 0.0
    %1417 = vmatprep.subr.mxu0 0.0
    %1418 = vmatpush1.msra.mxu0 0.0
    %1419 = vmatprep.subr.mxu0 0.0
    %1420 = vmatpush1.msra.mxu0 0.0
    %1421 = vmatprep.subr.mxu0 0.0
    %1422 = vmatpush1.msra.mxu0 0.0
    %1423 = vmatprep.subr.mxu0 0.0
    %1424 = vmatpush1.msra.mxu0 0.0
    %1425 = vmatprep.subr.mxu0 0.0
    %1426 = vmatpush1.msra.mxu0 0.0
    %1427 = vmatprep.subr.mxu0 0.0
    %1428 = vmatpush1.msra.mxu0 0.0
    %1429 = vmatprep.subr.mxu0 0.0
    %1430 = vmatpush1.msra.mxu0 0.0
    %1431 = vmatprep.subr.mxu0 0.0
    %1432 = vmatpush1.msra.mxu0 %v1203
    %1433 = vmatprep.subr.mxu0 0.0
    %1434 = vmatpush1.msra.mxu0 %v1202
    %1435 = vmatprep.subr.mxu0 0.0
    %1436 = vmatpush1.msra.mxu0 %v1201
    %1437 = vmatprep.subr.mxu0 0.0
    %1438 = vmatpush1.msra.mxu0 %v1200
    %1439 = vmatprep.subr.mxu0 0.0
    %1440 = vmatpush2.msra.mxu0 0.0
    %1441 = vmatprep.subr.mxu0 0.0
    %1442 = vmatpush2.msra.mxu0 0.0
    %1443 = vmatprep.subr.mxu0 0.0
    %1444 = vmatpush2.msra.mxu0 0.0
    %1445 = vmatprep.subr.mxu0 0.0
    %1446 = vmatpush2.msra.mxu0 0.0
    %1447 = vmatprep.subr.mxu0 0.0
    %1448 = vmatpush2.msra.mxu0 0.0
    %1449 = vmatprep.subr.mxu0 0.0
    %1450 = vmatpush2.msra.mxu0 0.0
    %1451 = vmatprep.subr.mxu0 0.0
    %1452 = vmatpush2.msra.mxu0 0.0
    %1453 = vmatprep.subr.mxu0 0.0
    %1454 = vmatpush2.msra.mxu0 0.0
    %1455 = vmatprep.subr.mxu0 0.0
    %1456 = vmatpush2.msra.mxu0 0.0
    %1457 = vmatprep.subr.mxu0 0.0
    %1458 = vmatpush2.msra.mxu0 0.0
    %1459 = vmatprep.subr.mxu0 0.0
    %1460 = vmatpush2.msra.mxu0 0.0
    %1461 = vmatprep.subr.mxu0 0.0
    %1462 = vmatpush2.msra.mxu0 0.0
    %1463 = vmatprep.subr.mxu0 0.0
    %1464 = vmatpush2.msra.mxu0 0.0
    %1465 = vmatprep.subr.mxu0 0.0
    %1466 = vmatpush2.msra.mxu0 0.0
    %1467 = vmatprep.subr.mxu0 0.0
    %1468 = vmatpush2.msra.mxu0 0.0
    %1469 = vmatprep.subr.mxu0 0.0
    %1470 = vmatpush2.msra.mxu0 0.0
    %1471 = vmatprep.mubr.f32.mxu0 0.0
    %1472 = vmatmul.mubr.f32.gmra.mxu0 %v1405
    %v1473 = vpop.f32.mrf.mxu0
    %v1474 = vadd.f32 0.0, %v1473
    %v1475 = vpop.f32.mrf.mxu0
    %1476 = vdwg.mxu0
    %v1477 = vadd.f32 %v1401, %v1474
    %v1478 = vxor.u32 %v1477, 2147483648
    %v1479 = vmul.f32 %v1478, 1.442695
    %v1480 = vpow.pop %v1479
    %v1481 = vadd.f32 %v1480, 1.0
    %v1482 = vrcp.pop %v1481
    %v1483 = vmul.f32 1.0, %v1482
    %v1484 = vtanh.pop %v1477
    %v1485 = vmul.f32 %v1483, %v1394
    %1487 = vrot.lane.b32.xlu0 %v1484, 64
    %v1488 = vpop.permute.xlu0 %1487
    %v1490 = vmul.f32 %v1483, %v1488
    %1492 = vrot.lane.b32.xlu0 %v1490, 32
    %v1493 = vpop.permute.xlu0 %1492
    %v1495 = vadd.f32 %v1485, %v1493
    %v1496 = vtanh.pop %v1495
    %1498 = vrot.lane.b32.xlu0 %v1496, 64
    %v1499 = vpop.permute.xlu0 %1498
    %v1501 = vmul.f32 %v1483, %v1499
    %v1502 = vld [vmem:[%s519] sm:$0xff]
    %1504 = vrot.lane.b32.xlu0 %v1501, 32
    %v1505 = vpop.permute.xlu0 %1504
    %v1506 = vsel %vm205, %v1505, 0
    %1508 = vmatprep.subr.mxu0 0.0
    %1509 = vmatpush1.msra.mxu0 0.0
    %1510 = vmatprep.subr.mxu0 0.0
    %1511 = vmatpush1.msra.mxu0 0.0
    %1512 = vmatprep.subr.mxu0 0.0
    %1513 = vmatpush1.msra.mxu0 0.0
    %1514 = vmatprep.subr.mxu0 0.0
    %1515 = vmatpush1.msra.mxu0 0.0
    %1516 = vmatprep.subr.mxu0 0.0
    %1517 = vmatpush1.msra.mxu0 0.0
    %1518 = vmatprep.subr.mxu0 0.0
    %1519 = vmatpush1.msra.mxu0 0.0
    %1520 = vmatprep.subr.mxu0 0.0
    %1521 = vmatpush1.msra.mxu0 0.0
    %1522 = vmatprep.subr.mxu0 0.0
    %1523 = vmatpush1.msra.mxu0 0.0
    %1524 = vmatprep.subr.mxu0 0.0
    %1525 = vmatpush1.msra.mxu0 0.0
    %1526 = vmatprep.subr.mxu0 0.0
    %1527 = vmatpush1.msra.mxu0 0.0
    %1528 = vmatprep.subr.mxu0 0.0
    %1529 = vmatpush1.msra.mxu0 0.0
    %1530 = vmatprep.subr.mxu0 0.0
    %1531 = vmatpush1.msra.mxu0 0.0
    %1532 = vmatprep.subr.mxu0 0.0
    %1533 = vmatpush1.msra.mxu0 %v1203
    %1534 = vmatprep.subr.mxu0 0.0
    %1535 = vmatpush1.msra.mxu0 %v1202
    %1536 = vmatprep.subr.mxu0 0.0
    %1537 = vmatpush1.msra.mxu0 %v1201
    %1538 = vmatprep.subr.mxu0 0.0
    %1539 = vmatpush1.msra.mxu0 %v1200
    %1540 = vmatprep.subr.mxu0 0.0
    %1541 = vmatpush2.msra.mxu0 0.0
    %1542 = vmatprep.subr.mxu0 0.0
    %1543 = vmatpush2.msra.mxu0 0.0
    %1544 = vmatprep.subr.mxu0 0.0
    %1545 = vmatpush2.msra.mxu0 0.0
    %1546 = vmatprep.subr.mxu0 0.0
    %1547 = vmatpush2.msra.mxu0 0.0
    %1548 = vmatprep.subr.mxu0 0.0
    %1549 = vmatpush2.msra.mxu0 0.0
    %1550 = vmatprep.subr.mxu0 0.0
    %1551 = vmatpush2.msra.mxu0 0.0
    %1552 = vmatprep.subr.mxu0 0.0
    %1553 = vmatpush2.msra.mxu0 0.0
    %1554 = vmatprep.subr.mxu0 0.0
    %1555 = vmatpush2.msra.mxu0 0.0
    %1556 = vmatprep.subr.mxu0 0.0
    %1557 = vmatpush2.msra.mxu0 0.0
    %1558 = vmatprep.subr.mxu0 0.0
    %1559 = vmatpush2.msra.mxu0 0.0
    %1560 = vmatprep.subr.mxu0 0.0
    %1561 = vmatpush2.msra.mxu0 0.0
    %1562 = vmatprep.subr.mxu0 0.0
    %1563 = vmatpush2.msra.mxu0 0.0
    %1564 = vmatprep.subr.mxu0 0.0
    %1565 = vmatpush2.msra.mxu0 0.0
    %1566 = vmatprep.subr.mxu0 0.0
    %1567 = vmatpush2.msra.mxu0 0.0
    %1568 = vmatprep.subr.mxu0 0.0
    %1569 = vmatpush2.msra.mxu0 0.0
    %1570 = vmatprep.subr.mxu0 0.0
    %1571 = vmatpush2.msra.mxu0 0.0
    %1572 = vmatprep.mubr.f32.mxu0 0.0
    %1573 = vmatmul.mubr.f32.gmra.mxu0 %v1506
    %v1574 = vpop.f32.mrf.mxu0
    %v1575 = vadd.f32 0.0, %v1574
    %v1576 = vpop.f32.mrf.mxu0
    %1577 = vdwg.mxu0
    %v1578 = vadd.f32 %v1502, %v1575
    %v1579 = vxor.u32 %v1578, 2147483648
    %v1580 = vmul.f32 %v1579, 1.442695
    %v1581 = vpow.pop %v1580
    %v1582 = vadd.f32 %v1581, 1.0
    %v1583 = vrcp.pop %v1582
    %v1584 = vmul.f32 1.0, %v1583
    %v1585 = vtanh.pop %v1578
    %v1586 = vmul.f32 %v1584, %v1495
    %1588 = vrot.lane.b32.xlu0 %v1585, 64
    %v1589 = vpop.permute.xlu0 %1588
    %v1591 = vmul.f32 %v1584, %v1589
    %1593 = vrot.lane.b32.xlu0 %v1591, 32
    %v1594 = vpop.permute.xlu0 %1593
    %v1596 = vadd.f32 %v1586, %v1594
    %v1597 = vtanh.pop %v1596
    %1599 = vrot.lane.b32.xlu0 %v1597, 64
    %v1600 = vpop.permute.xlu0 %1599
    %v1602 = vmul.f32 %v1584, %v1600
    %v1603 = vld [vmem:[%s624] sm:$0xff]
    %1605 = vrot.lane.b32.xlu0 %v1602, 32
    %v1606 = vpop.permute.xlu0 %1605
    %v1607 = vsel %vm205, %v1606, 0
    %1609 = vmatprep.subr.mxu0 0.0
    %1610 = vmatpush1.msra.mxu0 0.0
    %1611 = vmatprep.subr.mxu0 0.0
    %1612 = vmatpush1.msra.mxu0 0.0
    %1613 = vmatprep.subr.mxu0 0.0
    %1614 = vmatpush1.msra.mxu0 0.0
    %1615 = vmatprep.subr.mxu0 0.0
    %1616 = vmatpush1.msra.mxu0 0.0
    %1617 = vmatprep.subr.mxu0 0.0
    %1618 = vmatpush1.msra.mxu0 0.0
    %1619 = vmatprep.subr.mxu0 0.0
    %1620 = vmatpush1.msra.mxu0 0.0
    %1621 = vmatprep.subr.mxu0 0.0
    %1622 = vmatpush1.msra.mxu0 0.0
    %1623 = vmatprep.subr.mxu0 0.0
    %1624 = vmatpush1.msra.mxu0 0.0
    %1625 = vmatprep.subr.mxu0 0.0
    %1626 = vmatpush1.msra.mxu0 0.0
    %1627 = vmatprep.subr.mxu0 0.0
    %1628 = vmatpush1.msra.mxu0 0.0
    %1629 = vmatprep.subr.mxu0 0.0
    %1630 = vmatpush1.msra.mxu0 0.0
    %1631 = vmatprep.subr.mxu0 0.0
    %1632 = vmatpush1.msra.mxu0 0.0
    %1633 = vmatprep.subr.mxu0 0.0
    %1634 = vmatpush1.msra.mxu0 %v1203
    %1635 = vmatprep.subr.mxu0 0.0
    %1636 = vmatpush1.msra.mxu0 %v1202
    %1637 = vmatprep.subr.mxu0 0.0
    %1638 = vmatpush1.msra.mxu0 %v1201
    %1639 = vmatprep.subr.mxu0 0.0
    %1640 = vmatpush1.msra.mxu0 %v1200
    %1641 = vmatprep.subr.mxu0 0.0
    %1642 = vmatpush2.msra.mxu0 0.0
    %1643 = vmatprep.subr.mxu0 0.0
    %1644 = vmatpush2.msra.mxu0 0.0
    %1645 = vmatprep.subr.mxu0 0.0
    %1646 = vmatpush2.msra.mxu0 0.0
    %1647 = vmatprep.subr.mxu0 0.0
    %1648 = vmatpush2.msra.mxu0 0.0
    %1649 = vmatprep.subr.mxu0 0.0
    %1650 = vmatpush2.msra.mxu0 0.0
    %1651 = vmatprep.subr.mxu0 0.0
    %1652 = vmatpush2.msra.mxu0 0.0
    %1653 = vmatprep.subr.mxu0 0.0
    %1654 = vmatpush2.msra.mxu0 0.0
    %1655 = vmatprep.subr.mxu0 0.0
    %1656 = vmatpush2.msra.mxu0 0.0
    %1657 = vmatprep.subr.mxu0 0.0
    %1658 = vmatpush2.msra.mxu0 0.0
    %1659 = vmatprep.subr.mxu0 0.0
    %1660 = vmatpush2.msra.mxu0 0.0
    %1661 = vmatprep.subr.mxu0 0.0
    %1662 = vmatpush2.msra.mxu0 0.0
    %1663 = vmatprep.subr.mxu0 0.0
    %1664 = vmatpush2.msra.mxu0 0.0
    %1665 = vmatprep.subr.mxu0 0.0
    %1666 = vmatpush2.msra.mxu0 0.0
    %1667 = vmatprep.subr.mxu0 0.0
    %1668 = vmatpush2.msra.mxu0 0.0
    %1669 = vmatprep.subr.mxu0 0.0
    %1670 = vmatpush2.msra.mxu0 0.0
    %1671 = vmatprep.subr.mxu0 0.0
    %1672 = vmatpush2.msra.mxu0 0.0
    %1673 = vmatprep.mubr.f32.mxu0 0.0
    %1674 = vmatmul.mubr.f32.gmra.mxu0 %v1607
    %v1675 = vpop.f32.mrf.mxu0
    %v1676 = vadd.f32 0.0, %v1675
    %v1677 = vpop.f32.mrf.mxu0
    %1678 = vdwg.mxu0
    %v1679 = vadd.f32 %v1603, %v1676
    %v1680 = vxor.u32 %v1679, 2147483648
    %v1681 = vmul.f32 %v1680, 1.442695
    %v1682 = vpow.pop %v1681
    %v1683 = vadd.f32 %v1682, 1.0
    %v1684 = vrcp.pop %v1683
    %v1685 = vmul.f32 1.0, %v1684
    %v1686 = vtanh.pop %v1679
    %v1687 = vmul.f32 %v1685, %v1596
    %1689 = vrot.lane.b32.xlu0 %v1686, 64
    %v1690 = vpop.permute.xlu0 %1689
    %v1692 = vmul.f32 %v1685, %v1690
    %1694 = vrot.lane.b32.xlu0 %v1692, 32
    %v1695 = vpop.permute.xlu0 %1694
    %v1697 = vadd.f32 %v1687, %v1695
    %v1698 = vtanh.pop %v1697
    %1700 = vrot.lane.b32.xlu0 %v1698, 64
    %v1701 = vpop.permute.xlu0 %1700
    %v1703 = vmul.f32 %v1685, %v1701
    %v1704 = vld [vmem:[%s729] sm:$0xff]
    %1706 = vrot.lane.b32.xlu0 %v1703, 32
    %v1707 = vpop.permute.xlu0 %1706
    %v1708 = vsel %vm205, %v1707, 0
    %1710 = vmatprep.subr.mxu0 0.0
    %1711 = vmatpush1.msra.mxu0 0.0
    %1712 = vmatprep.subr.mxu0 0.0
    %1713 = vmatpush1.msra.mxu0 0.0
    %1714 = vmatprep.subr.mxu0 0.0
    %1715 = vmatpush1.msra.mxu0 0.0
    %1716 = vmatprep.subr.mxu0 0.0
    %1717 = vmatpush1.msra.mxu0 0.0
    %1718 = vmatprep.subr.mxu0 0.0
    %1719 = vmatpush1.msra.mxu0 0.0
    %1720 = vmatprep.subr.mxu0 0.0
    %1721 = vmatpush1.msra.mxu0 0.0
    %1722 = vmatprep.subr.mxu0 0.0
    %1723 = vmatpush1.msra.mxu0 0.0
    %1724 = vmatprep.subr.mxu0 0.0
    %1725 = vmatpush1.msra.mxu0 0.0
    %1726 = vmatprep.subr.mxu0 0.0
    %1727 = vmatpush1.msra.mxu0 0.0
    %1728 = vmatprep.subr.mxu0 0.0
    %1729 = vmatpush1.msra.mxu0 0.0
    %1730 = vmatprep.subr.mxu0 0.0
    %1731 = vmatpush1.msra.mxu0 0.0
    %1732 = vmatprep.subr.mxu0 0.0
    %1733 = vmatpush1.msra.mxu0 0.0
    %1734 = vmatprep.subr.mxu0 0.0
    %1735 = vmatpush1.msra.mxu0 %v1203
    %1736 = vmatprep.subr.mxu0 0.0
    %1737 = vmatpush1.msra.mxu0 %v1202
    %1738 = vmatprep.subr.mxu0 0.0
    %1739 = vmatpush1.msra.mxu0 %v1201
    %1740 = vmatprep.subr.mxu0 0.0
    %1741 = vmatpush1.msra.mxu0 %v1200
    %1742 = vmatprep.subr.mxu0 0.0
    %1743 = vmatpush2.msra.mxu0 0.0
    %1744 = vmatprep.subr.mxu0 0.0
    %1745 = vmatpush2.msra.mxu0 0.0
    %1746 = vmatprep.subr.mxu0 0.0
    %1747 = vmatpush2.msra.mxu0 0.0
    %1748 = vmatprep.subr.mxu0 0.0
    %1749 = vmatpush2.msra.mxu0 0.0
    %1750 = vmatprep.subr.mxu0 0.0
    %1751 = vmatpush2.msra.mxu0 0.0
    %1752 = vmatprep.subr.mxu0 0.0
    %1753 = vmatpush2.msra.mxu0 0.0
    %1754 = vmatprep.subr.mxu0 0.0
    %1755 = vmatpush2.msra.mxu0 0.0
    %1756 = vmatprep.subr.mxu0 0.0
    %1757 = vmatpush2.msra.mxu0 0.0
    %1758 = vmatprep.subr.mxu0 0.0
    %1759 = vmatpush2.msra.mxu0 0.0
    %1760 = vmatprep.subr.mxu0 0.0
    %1761 = vmatpush2.msra.mxu0 0.0
    %1762 = vmatprep.subr.mxu0 0.0
    %1763 = vmatpush2.msra.mxu0 0.0
    %1764 = vmatprep.subr.mxu0 0.0
    %1765 = vmatpush2.msra.mxu0 0.0
    %1766 = vmatprep.subr.mxu0 0.0
    %1767 = vmatpush2.msra.mxu0 0.0
    %1768 = vmatprep.subr.mxu0 0.0
    %1769 = vmatpush2.msra.mxu0 0.0
    %1770 = vmatprep.subr.mxu0 0.0
    %1771 = vmatpush2.msra.mxu0 0.0
    %1772 = vmatprep.subr.mxu0 0.0
    %1773 = vmatpush2.msra.mxu0 0.0
    %1774 = vmatprep.mubr.f32.mxu0 0.0
    %1775 = vmatmul.mubr.f32.gmra.mxu0 %v1708
    %v1776 = vpop.f32.mrf.mxu0
    %v1777 = vadd.f32 0.0, %v1776
    %v1778 = vpop.f32.mrf.mxu0
    %1779 = vdwg.mxu0
    %v1780 = vadd.f32 %v1704, %v1777
    %v1781 = vxor.u32 %v1780, 2147483648
    %v1782 = vmul.f32 %v1781, 1.442695
    %v1783 = vpow.pop %v1782
    %v1784 = vadd.f32 %v1783, 1.0
    %v1785 = vrcp.pop %v1784
    %v1786 = vmul.f32 1.0, %v1785
    %v1787 = vtanh.pop %v1780
    %v1788 = vmul.f32 %v1786, %v1697
    %1790 = vrot.lane.b32.xlu0 %v1787, 64
    %v1791 = vpop.permute.xlu0 %1790
    %v1793 = vmul.f32 %v1786, %v1791
    %1795 = vrot.lane.b32.xlu0 %v1793, 32
    %v1796 = vpop.permute.xlu0 %1795
    %v1798 = vadd.f32 %v1788, %v1796
    %v1799 = vtanh.pop %v1798
    %1801 = vrot.lane.b32.xlu0 %v1799, 64
    %v1802 = vpop.permute.xlu0 %1801
    %v1804 = vmul.f32 %v1786, %v1802
    %v1805 = vld [vmem:[%s834] sm:$0xff]
    %1807 = vrot.lane.b32.xlu0 %v1804, 32
    %v1808 = vpop.permute.xlu0 %1807
    %v1809 = vsel %vm205, %v1808, 0
    %1811 = vmatprep.subr.mxu0 0.0
    %1812 = vmatpush1.msra.mxu0 0.0
    %1813 = vmatprep.subr.mxu0 0.0
    %1814 = vmatpush1.msra.mxu0 0.0
    %1815 = vmatprep.subr.mxu0 0.0
    %1816 = vmatpush1.msra.mxu0 0.0
    %1817 = vmatprep.subr.mxu0 0.0
    %1818 = vmatpush1.msra.mxu0 0.0
    %1819 = vmatprep.subr.mxu0 0.0
    %1820 = vmatpush1.msra.mxu0 0.0
    %1821 = vmatprep.subr.mxu0 0.0
    %1822 = vmatpush1.msra.mxu0 0.0
    %1823 = vmatprep.subr.mxu0 0.0
    %1824 = vmatpush1.msra.mxu0 0.0
    %1825 = vmatprep.subr.mxu0 0.0
    %1826 = vmatpush1.msra.mxu0 0.0
    %1827 = vmatprep.subr.mxu0 0.0
    %1828 = vmatpush1.msra.mxu0 0.0
    %1829 = vmatprep.subr.mxu0 0.0
    %1830 = vmatpush1.msra.mxu0 0.0
    %1831 = vmatprep.subr.mxu0 0.0
    %1832 = vmatpush1.msra.mxu0 0.0
    %1833 = vmatprep.subr.mxu0 0.0
    %1834 = vmatpush1.msra.mxu0 0.0
    %1835 = vmatprep.subr.mxu0 0.0
    %1836 = vmatpush1.msra.mxu0 %v1203
    %1837 = vmatprep.subr.mxu0 0.0
    %1838 = vmatpush1.msra.mxu0 %v1202
    %1839 = vmatprep.subr.mxu0 0.0
    %1840 = vmatpush1.msra.mxu0 %v1201
    %1841 = vmatprep.subr.mxu0 0.0
    %1842 = vmatpush1.msra.mxu0 %v1200
    %1843 = vmatprep.subr.mxu0 0.0
    %1844 = vmatpush2.msra.mxu0 0.0
    %1845 = vmatprep.subr.mxu0 0.0
    %1846 = vmatpush2.msra.mxu0 0.0
    %1847 = vmatprep.subr.mxu0 0.0
    %1848 = vmatpush2.msra.mxu0 0.0
    %1849 = vmatprep.subr.mxu0 0.0
    %1850 = vmatpush2.msra.mxu0 0.0
    %1851 = vmatprep.subr.mxu0 0.0
    %1852 = vmatpush2.msra.mxu0 0.0
    %1853 = vmatprep.subr.mxu0 0.0
    %1854 = vmatpush2.msra.mxu0 0.0
    %1855 = vmatprep.subr.mxu0 0.0
    %1856 = vmatpush2.msra.mxu0 0.0
    %1857 = vmatprep.subr.mxu0 0.0
    %1858 = vmatpush2.msra.mxu0 0.0
    %1859 = vmatprep.subr.mxu0 0.0
    %1860 = vmatpush2.msra.mxu0 0.0
    %1861 = vmatprep.subr.mxu0 0.0
    %1862 = vmatpush2.msra.mxu0 0.0
    %1863 = vmatprep.subr.mxu0 0.0
    %1864 = vmatpush2.msra.mxu0 0.0
    %1865 = vmatprep.subr.mxu0 0.0
    %1866 = vmatpush2.msra.mxu0 0.0
    %1867 = vmatprep.subr.mxu0 0.0
    %1868 = vmatpush2.msra.mxu0 0.0
    %1869 = vmatprep.subr.mxu0 0.0
    %1870 = vmatpush2.msra.mxu0 0.0
    %1871 = vmatprep.subr.mxu0 0.0
    %1872 = vmatpush2.msra.mxu0 0.0
    %1873 = vmatprep.subr.mxu0 0.0
    %1874 = vmatpush2.msra.mxu0 0.0
    %1875 = vmatprep.mubr.f32.mxu0 0.0
    %1876 = vmatmul.mubr.f32.gmra.mxu0 %v1809
    %v1877 = vpop.f32.mrf.mxu0
    %v1878 = vadd.f32 0.0, %v1877
    %v1879 = vpop.f32.mrf.mxu0
    %1880 = vdwg.mxu0
    %v1881 = vadd.f32 %v1805, %v1878
    %v1882 = vxor.u32 %v1881, 2147483648
    %v1883 = vmul.f32 %v1882, 1.442695
    %v1884 = vpow.pop %v1883
    %v1885 = vadd.f32 %v1884, 1.0
    %v1886 = vrcp.pop %v1885
    %v1887 = vmul.f32 1.0, %v1886
    %v1888 = vtanh.pop %v1881
    %v1889 = vmul.f32 %v1887, %v1798
    %1891 = vrot.lane.b32.xlu0 %v1888, 64
    %v1892 = vpop.permute.xlu0 %1891
    %v1894 = vmul.f32 %v1887, %v1892
    %1896 = vrot.lane.b32.xlu0 %v1894, 32
    %v1897 = vpop.permute.xlu0 %1896
    %v1899 = vadd.f32 %v1889, %v1897
    %v1900 = vtanh.pop %v1899
    %1902 = vrot.lane.b32.xlu0 %v1900, 64
    %v1903 = vpop.permute.xlu0 %1902
    %v1905 = vmul.f32 %v1887, %v1903
    %v1906 = vld [vmem:[%s939] sm:$0xff]
    %1908 = vrot.lane.b32.xlu0 %v1905, 32
    %v1909 = vpop.permute.xlu0 %1908
    %v1910 = vsel %vm205, %v1909, 0
    %1912 = vmatprep.subr.mxu0 0.0
    %1913 = vmatpush1.msra.mxu0 0.0
    %1914 = vmatprep.subr.mxu0 0.0
    %1915 = vmatpush1.msra.mxu0 0.0
    %1916 = vmatprep.subr.mxu0 0.0
    %1917 = vmatpush1.msra.mxu0 0.0
    %1918 = vmatprep.subr.mxu0 0.0
    %1919 = vmatpush1.msra.mxu0 0.0
    %1920 = vmatprep.subr.mxu0 0.0
    %1921 = vmatpush1.msra.mxu0 0.0
    %1922 = vmatprep.subr.mxu0 0.0
    %1923 = vmatpush1.msra.mxu0 0.0
    %1924 = vmatprep.subr.mxu0 0.0
    %1925 = vmatpush1.msra.mxu0 0.0
    %1926 = vmatprep.subr.mxu0 0.0
    %1927 = vmatpush1.msra.mxu0 0.0
    %1928 = vmatprep.subr.mxu0 0.0
    %1929 = vmatpush1.msra.mxu0 0.0
    %1930 = vmatprep.subr.mxu0 0.0
    %1931 = vmatpush1.msra.mxu0 0.0
    %1932 = vmatprep.subr.mxu0 0.0
    %1933 = vmatpush1.msra.mxu0 0.0
    %1934 = vmatprep.subr.mxu0 0.0
    %1935 = vmatpush1.msra.mxu0 0.0
    %1936 = vmatprep.subr.mxu0 0.0
    %1937 = vmatpush1.msra.mxu0 %v1203
    %1938 = vmatprep.subr.mxu0 0.0
    %1939 = vmatpush1.msra.mxu0 %v1202
    %1940 = vmatprep.subr.mxu0 0.0
    %1941 = vmatpush1.msra.mxu0 %v1201
    %1942 = vmatprep.subr.mxu0 0.0
    %1943 = vmatpush1.msra.mxu0 %v1200
    %1944 = vmatprep.subr.mxu0 0.0
    %1945 = vmatpush2.msra.mxu0 0.0
    %1946 = vmatprep.subr.mxu0 0.0
    %1947 = vmatpush2.msra.mxu0 0.0
    %1948 = vmatprep.subr.mxu0 0.0
    %1949 = vmatpush2.msra.mxu0 0.0
    %1950 = vmatprep.subr.mxu0 0.0
    %1951 = vmatpush2.msra.mxu0 0.0
    %1952 = vmatprep.subr.mxu0 0.0
    %1953 = vmatpush2.msra.mxu0 0.0
    %1954 = vmatprep.subr.mxu0 0.0
    %1955 = vmatpush2.msra.mxu0 0.0
    %1956 = vmatprep.subr.mxu0 0.0
    %1957 = vmatpush2.msra.mxu0 0.0
    %1958 = vmatprep.subr.mxu0 0.0
    %1959 = vmatpush2.msra.mxu0 0.0
    %1960 = vmatprep.subr.mxu0 0.0
    %1961 = vmatpush2.msra.mxu0 0.0
    %1962 = vmatprep.subr.mxu0 0.0
    %1963 = vmatpush2.msra.mxu0 0.0
    %1964 = vmatprep.subr.mxu0 0.0
    %1965 = vmatpush2.msra.mxu0 0.0
    %1966 = vmatprep.subr.mxu0 0.0
    %1967 = vmatpush2.msra.mxu0 0.0
    %1968 = vmatprep.subr.mxu0 0.0
    %1969 = vmatpush2.msra.mxu0 0.0
    %1970 = vmatprep.subr.mxu0 0.0
    %1971 = vmatpush2.msra.mxu0 0.0
    %1972 = vmatprep.subr.mxu0 0.0
    %1973 = vmatpush2.msra.mxu0 0.0
    %1974 = vmatprep.subr.mxu0 0.0
    %1975 = vmatpush2.msra.mxu0 0.0
    %1976 = vmatprep.mubr.f32.mxu0 0.0
    %1977 = vmatmul.mubr.f32.gmra.mxu0 %v1910
    %v1978 = vpop.f32.mrf.mxu0
    %v1979 = vadd.f32 0.0, %v1978
    %v1980 = vpop.f32.mrf.mxu0
    %1981 = vdwg.mxu0
    %v1982 = vadd.f32 %v1906, %v1979
    %v1983 = vxor.u32 %v1982, 2147483648
    %v1984 = vmul.f32 %v1983, 1.442695
    %v1985 = vpow.pop %v1984
    %v1986 = vadd.f32 %v1985, 1.0
    %v1987 = vrcp.pop %v1986
    %v1988 = vmul.f32 1.0, %v1987
    %v1989 = vtanh.pop %v1982
    %v1990 = vmul.f32 %v1988, %v1899
    %1992 = vrot.lane.b32.xlu0 %v1989, 64
    %v1993 = vpop.permute.xlu0 %1992
    %v1995 = vmul.f32 %v1988, %v1993
    %1997 = vrot.lane.b32.xlu0 %v1995, 32
    %v1998 = vpop.permute.xlu0 %1997
    %v2000 = vadd.f32 %v1990, %v1998
    %v2001 = vtanh.pop %v2000
    %2003 = vrot.lane.b32.xlu0 %v2001, 64
    %v2004 = vpop.permute.xlu0 %2003
    %v2006 = vmul.f32 %v1988, %v2004
    %v2007 = vld [vmem:[%s7] sm:$0xff]
    %v2008 = vld [vmem:[%s7 + $0x8] sm:$0xff]
    %v2009 = vld [vmem:[%s7 + $0x10] sm:$0xff]
    %v2010 = vld [vmem:[%s7 + $0x18] sm:$0xff]
    %v2011 = vld [vmem:[#allocation4] sm:$0x1]
    %v2013 = vlaneseq
    %v2014 = vshrl.u32 %v2013, 7
    %v2015 = vsub.s32 0, %v2014
    %v2016 = vrot.slane %v2011, %v2015
    %2019 = vrot.lane.b32.xlu0 %v2006, 32
    %v2020 = vpop.permute.xlu0 %2019
    %v2021 = vsel %vm205, %v2020, 0
    %2023 = vmatprep.subr.mxu0 0.0
    %2024 = vmatpush1.msra.mxu0 0.0
    %2025 = vmatprep.subr.mxu0 0.0
    %2026 = vmatpush1.msra.mxu0 0.0
    %2027 = vmatprep.subr.mxu0 0.0
    %2028 = vmatpush1.msra.mxu0 0.0
    %2029 = vmatprep.subr.mxu0 0.0
    %2030 = vmatpush1.msra.mxu0 0.0
    %2031 = vmatprep.subr.mxu0 0.0
    %2032 = vmatpush1.msra.mxu0 0.0
    %2033 = vmatprep.subr.mxu0 0.0
    %2034 = vmatpush1.msra.mxu0 0.0
    %2035 = vmatprep.subr.mxu0 0.0
    %2036 = vmatpush1.msra.mxu0 0.0
    %2037 = vmatprep.subr.mxu0 0.0
    %2038 = vmatpush1.msra.mxu0 0.0
    %2039 = vmatprep.subr.mxu0 0.0
    %2040 = vmatpush1.msra.mxu0 0.0
    %2041 = vmatprep.subr.mxu0 0.0
    %2042 = vmatpush1.msra.mxu0 0.0
    %2043 = vmatprep.subr.mxu0 0.0
    %2044 = vmatpush1.msra.mxu0 0.0
    %2045 = vmatprep.subr.mxu0 0.0
    %2046 = vmatpush1.msra.mxu0 0.0
    %2047 = vmatprep.subr.mxu0 0.0
    %2048 = vmatpush1.msra.mxu0 %v2010
    %2049 = vmatprep.subr.mxu0 0.0
    %2050 = vmatpush1.msra.mxu0 %v2009
    %2051 = vmatprep.subr.mxu0 0.0
    %2052 = vmatpush1.msra.mxu0 %v2008
    %2053 = vmatprep.subr.mxu0 0.0
    %2054 = vmatpush1.msra.mxu0 %v2007
    %2055 = vmatprep.subr.mxu0 0.0
    %2056 = vmatpush2.msra.mxu0 0.0
    %2057 = vmatprep.subr.mxu0 0.0
    %2058 = vmatpush2.msra.mxu0 0.0
    %2059 = vmatprep.subr.mxu0 0.0
    %2060 = vmatpush2.msra.mxu0 0.0
    %2061 = vmatprep.subr.mxu0 0.0
    %2062 = vmatpush2.msra.mxu0 0.0
    %2063 = vmatprep.subr.mxu0 0.0
    %2064 = vmatpush2.msra.mxu0 0.0
    %2065 = vmatprep.subr.mxu0 0.0
    %2066 = vmatpush2.msra.mxu0 0.0
    %2067 = vmatprep.subr.mxu0 0.0
    %2068 = vmatpush2.msra.mxu0 0.0
    %2069 = vmatprep.subr.mxu0 0.0
    %2070 = vmatpush2.msra.mxu0 0.0
    %2071 = vmatprep.subr.mxu0 0.0
    %2072 = vmatpush2.msra.mxu0 0.0
    %2073 = vmatprep.subr.mxu0 0.0
    %2074 = vmatpush2.msra.mxu0 0.0
    %2075 = vmatprep.subr.mxu0 0.0
    %2076 = vmatpush2.msra.mxu0 0.0
    %2077 = vmatprep.subr.mxu0 0.0
    %2078 = vmatpush2.msra.mxu0 0.0
    %2079 = vmatprep.subr.mxu0 0.0
    %2080 = vmatpush2.msra.mxu0 0.0
    %2081 = vmatprep.subr.mxu0 0.0
    %2082 = vmatpush2.msra.mxu0 0.0
    %2083 = vmatprep.subr.mxu0 0.0
    %2084 = vmatpush2.msra.mxu0 0.0
    %2085 = vmatprep.subr.mxu0 0.0
    %2086 = vmatpush2.msra.mxu0 0.0
    %2087 = vmatprep.mubr.f32.mxu0 0.0
    %2088 = vmatmul.mubr.f32.gmra.mxu0 %v2021
    %v2089 = vpop.f32.mrf.mxu0
    %v2090 = vadd.f32 %v2016, %v2089
    %v2091 = vpop.f32.mrf.mxu0
    %2092 = vdwg.mxu0
    %vm2093 = vcmask 7168
    %2094 = vst.msk [vmem:[%s9] sm:$0xff] %vm2093, %v2090
    // Predicated region
    $region42: #{tpu_custom_call.1} parent=1 // pred_check
      _
    $region43: #{tpu_custom_call.1} parent=1 // pred_check_branch
      %2096 = sbr.rel (0) target = $region45
    $region44: #{tpu_custom_call.1} parent=1 // pred_region
      _
    $region45: #{tpu_custom_call.1} parent=1 // pred_fallthru
      _
    // Predicated region
    $region46: #{tpu_custom_call.1} parent=1 // pred_check
      _
    $region47: #{tpu_custom_call.1} parent=1 // pred_check_branch
      %2098 = sbr.rel (0) target = $region49
    $region48: #{tpu_custom_call.1} parent=1 // pred_region
      _
    $region49: #{tpu_custom_call.1} parent=1 // pred_fallthru
      _
    %2099 = vsyncpa [#allocation6], 1

</llo_original>
